<compile_context>
chip_gen: v6e
topology: v6e:2x2x1
jax: 0.10.0
libtpu: 0.0.40
codegen_flags: <defaults>
</compile_context>

<pallas_src>
import functools

import jax
import jax.numpy as jnp
from jax.experimental import pallas as pl
from jax.experimental.pallas import tpu as pltpu

P_DROP = 0.1
# Dropout via integer compare: keep iff rbits >= KEEP_THRESH, rbits ~ U[0, 2^31-1).
KEEP_THRESH = int(round(P_DROP * (2**31 - 1)))
KEEP_SCALE = 1.0 / (1.0 - P_DROP)


def _attn_dropout_kernel(training, q_ref, k_ref, v_ref, bits_ref, o_ref):
    # q_ref/k_ref/v_ref/o_ref: (GH, S, D) slab of heads; bits_ref: (GH, S, S).
    # All heads in the slab go through the MXU as one batched matmul per step.
    qb = q_ref[...].astype(jnp.bfloat16)
    kb = k_ref[...].astype(jnp.bfloat16)
    # Contract q and k over their last (feature) dims directly -- no .T in-kernel.
    s = jnp.einsum("gqd,gkd->gqk", qb, kb, preferred_element_type=jnp.float32)

    if training:
        # Bernoulli(keep = 1 - p) mask, scaled by 1/(1-p) (inverted dropout).
        keep = bits_ref[...] >= jnp.int32(KEEP_THRESH)
        s = jnp.where(keep, s * jnp.float32(KEEP_SCALE), jnp.float32(0.0))

    out = jnp.einsum(
        "gqk,gkd->gqd",
        s.astype(jnp.bfloat16),
        v_ref[...].astype(jnp.bfloat16),
        preferred_element_type=jnp.float32,
    )
    o_ref[...] = out.astype(o_ref.dtype)


def attn_dropout(q, k, v, *, dropout_bits=None, training=True, heads_per_block=None):
    """q, k, v: (B, H, S, D) float32. Returns (B, H, S, D).

    dropout_bits: optional int32 array of shape (B*H, S, S) with uniform values
    in [0, 2^31-1); generated with jax.random if not supplied (training only).
    """
    B, H, S, D = q.shape
    G = B * H
    qf = q.reshape(G, S, D)
    kf = k.reshape(G, S, D)
    vf = v.reshape(G, S, D)

    if training:
        if dropout_bits is None:
            # TODO(synk): in-kernel pltpu.prng_* would avoid streaming the mask
            # from HBM, but it has no CPU-interpret lowering; generate host-side.
            dropout_bits = jax.random.randint(
                jax.random.PRNGKey(0), (G, S, S), 0, 2**31 - 1, dtype=jnp.int32)
        bits = dropout_bits.reshape(G, S, S)
    else:
        bits = jnp.zeros((G, S, S), dtype=jnp.int32)  # unused by the kernel

    if heads_per_block is None:
        # grid=(2,) -> both v7x TensorCores get half the heads; on v5e/v6e this
        # is just 2 cheap steps instead of 8.
        heads_per_block = G // 2 if G % 2 == 0 else G
    assert G % heads_per_block == 0
    n_blocks = G // heads_per_block

    head_spec = pl.BlockSpec((heads_per_block, S, D), lambda g: (g, 0, 0))
    bits_spec = pl.BlockSpec((heads_per_block, S, S), lambda g: (g, 0, 0))

    flops = 4 * G * S * S * D                       # two matmuls, 2*M*N*K each
    bytes_accessed = 4 * (4 * G * S * D + G * S * S)  # q,k,v,out + dropout bits

    out = pl.pallas_call(
        functools.partial(_attn_dropout_kernel, training),
        out_shape=jax.ShapeDtypeStruct((G, S, D), q.dtype),
        grid=(n_blocks,),
        in_specs=[head_spec, head_spec, head_spec, bits_spec],
        out_specs=head_spec,
        compiler_params=pltpu.CompilerParams(dimension_semantics=("parallel",)),
        cost_estimate=pl.CostEstimate(
            flops=flops, transcendentals=0, bytes_accessed=bytes_accessed),
    )(qf, kf, vf, bits)
    return out.reshape(B, H, S, D)


def _reference(q, k, v, dropout_bits=None, training=True):
    """Pure-JAX reference with numerics matching the kernel (bf16 matmul, f32 acc)."""
    qb = q.astype(jnp.bfloat16)
    kb = k.astype(jnp.bfloat16)
    vb = v.astype(jnp.bfloat16)
    s = jnp.einsum("bhqd,bhkd->bhqk", qb, kb, preferred_element_type=jnp.float32)
    if training:
        keep = dropout_bits.reshape(s.shape) >= jnp.int32(KEEP_THRESH)
        s = jnp.where(keep, s * jnp.float32(KEEP_SCALE), jnp.float32(0.0))
    return jnp.einsum("bhqk,bhkd->bhqd", s.astype(jnp.bfloat16), vb,
                      preferred_element_type=jnp.float32)


if __name__ == "__main__":
    key = jax.random.PRNGKey(0)
    kq, kk, kv, kd = jax.random.split(key, 4)
    B, H, S, D = 1, 8, 96, 96
    q = jax.random.normal(kq, (B, H, S, D), dtype=jnp.float32)
    k = jax.random.normal(kk, (B, H, S, D), dtype=jnp.float32)
    v = jax.random.normal(kv, (B, H, S, D), dtype=jnp.float32)
    bits = jax.random.randint(kd, (B * H, S, S), 0, 2**31 - 1, dtype=jnp.int32)

    # Training mode (dropout active, matching the PyTorch module's default state).
    out_train = jax.block_until_ready(
        attn_dropout(q, k, v, dropout_bits=bits, training=True))
    ref_train = _reference(q, k, v, dropout_bits=bits, training=True)
    assert out_train.shape == (B, H, S, D)
    # Tolerance covers possible MXU-vs-XLA f32 accumulation-order differences.
    assert jnp.allclose(out_train, ref_train, rtol=2e-2, atol=2e-1), (
        "train mismatch, max abs err = "
        f"{float(jnp.max(jnp.abs(out_train - ref_train)))}")

    # Eval mode (no dropout) cross-check.
    out_eval = jax.block_until_ready(attn_dropout(q, k, v, training=False))
    ref_eval = _reference(q, k, v, training=False)
    assert jnp.allclose(out_eval, ref_eval, rtol=2e-2, atol=2e-1), (
        "eval mismatch, max abs err = "
        f"{float(jnp.max(jnp.abs(out_eval - ref_eval)))}")

    print("KERNEL_OK")
</pallas_src>

<mosaic_0001>
module attributes {stable_mosaic.version = 11 : i64} {
  func.func @_attn_dropout_kernel(%arg0: i32, %arg1: memref<4x96x96xf32, #tpu.memory_space<vmem>>, %arg2: memref<4x96x96xf32, #tpu.memory_space<vmem>>, %arg3: memref<4x96x96xf32, #tpu.memory_space<vmem>>, %arg4: memref<4x96x96xi32, #tpu.memory_space<vmem>>, %arg5: memref<4x96x96xf32, #tpu.memory_space<vmem>>) attributes {dimension_semantics = [#tpu.dimension_semantics<parallel>], iteration_bounds = array<i64: 2>, scalar_prefetch = 0 : i64, scratch_operands = 0 : i64, tpu.core_type = #tpu.core_type<tc>, window_params = [{transform_indices = @transform_0, window_bounds = array<i64: 4, 96, 96>}, {transform_indices = @transform_1, window_bounds = array<i64: 4, 96, 96>}, {transform_indices = @transform_2, window_bounds = array<i64: 4, 96, 96>}, {transform_indices = @transform_3, window_bounds = array<i64: 4, 96, 96>}, {transform_indices = @transform_4, window_bounds = array<i64: 4, 96, 96>}]} {
    %c0 = arith.constant 0 : index
    %c0_0 = arith.constant 0 : index
    %c0_1 = arith.constant 0 : index
    %0 = vector.load %arg1[%c0, %c0_0, %c0_1] : memref<4x96x96xf32, #tpu.memory_space<vmem>>, vector<4x96x96xf32>
    %1 = arith.truncf %0 : vector<4x96x96xf32> to vector<4x96x96xbf16>
    %c0_2 = arith.constant 0 : index
    %c0_3 = arith.constant 0 : index
    %c0_4 = arith.constant 0 : index
    %2 = vector.load %arg2[%c0_2, %c0_3, %c0_4] : memref<4x96x96xf32, #tpu.memory_space<vmem>>, vector<4x96x96xf32>
    %3 = arith.truncf %2 : vector<4x96x96xf32> to vector<4x96x96xbf16>
    "tpu.trace_start"() <{level = 10 : i32, message = "gqd,gkd->gqk"}> : () -> ()
    %cst = arith.constant dense<0.000000e+00> : vector<4x96x96xf32>
    %4 = tpu.matmul %1, %3, %cst {dimension_numbers = #tpu.dot_dimension_numbers<[2], [2], [1], [1], [0, 0, 0, 1, 1, 1], [0], [0]>} : vector<4x96x96xbf16>, vector<4x96x96xbf16>, vector<4x96x96xf32> -> vector<4x96x96xf32>
    "tpu.trace_stop"() : () -> ()
    %c0_5 = arith.constant 0 : index
    %c0_6 = arith.constant 0 : index
    %c0_7 = arith.constant 0 : index
    %5 = vector.load %arg4[%c0_5, %c0_6, %c0_7] : memref<4x96x96xi32, #tpu.memory_space<vmem>>, vector<4x96x96xi32>
    %c214748365_i32 = arith.constant 214748365 : i32
    %6 = vector.broadcast %c214748365_i32 : i32 to vector<4x96x96xi32>
    %7 = arith.cmpi sge, %5, %6 : vector<4x96x96xi32>
    %cst_8 = arith.constant 1.11111116 : f32
    %8 = vector.broadcast %cst_8 : f32 to vector<4x96x96xf32>
    %9 = arith.mulf %4, %8 : vector<4x96x96xf32>
    %cst_9 = arith.constant 0.000000e+00 : f32
    %10 = vector.broadcast %cst_9 : f32 to vector<4x96x96xf32>
    %11 = arith.select %7, %9, %10 : vector<4x96x96xi1>, vector<4x96x96xf32>
    %12 = arith.truncf %11 : vector<4x96x96xf32> to vector<4x96x96xbf16>
    %c0_10 = arith.constant 0 : index
    %c0_11 = arith.constant 0 : index
    %c0_12 = arith.constant 0 : index
    %13 = vector.load %arg3[%c0_10, %c0_11, %c0_12] : memref<4x96x96xf32, #tpu.memory_space<vmem>>, vector<4x96x96xf32>
    %14 = arith.truncf %13 : vector<4x96x96xf32> to vector<4x96x96xbf16>
    "tpu.trace_start"() <{level = 10 : i32, message = "gqk,gkd->gqd"}> : () -> ()
    %cst_13 = arith.constant dense<0.000000e+00> : vector<4x96x96xf32>
    %15 = tpu.matmul %12, %14, %cst_13 {dimension_numbers = #tpu.dot_dimension_numbers<[2], [1], [1], [2], [0, 0, 0, 1, 1, 2], [0], [0]>} : vector<4x96x96xbf16>, vector<4x96x96xbf16>, vector<4x96x96xf32> -> vector<4x96x96xf32>
    "tpu.trace_stop"() : () -> ()
    %c0_14 = arith.constant 0 : index
    %c0_15 = arith.constant 0 : index
    %c0_16 = arith.constant 0 : index
    %16 = vector.load %arg5[%c0_14, %c0_15, %c0_16] : memref<4x96x96xf32, #tpu.memory_space<vmem>>, vector<4x96x96xf32>
    tpu.vector_store %arg5[%c0_14, %c0_15, %c0_16], %15 {strides = array<i32>} : memref<4x96x96xf32, #tpu.memory_space<vmem>>, vector<4x96x96xf32>,
    return
  }
  func.func @transform_0(%arg0: i32) -> (i32, i32, i32) {
    %c0_i32 = arith.constant 0 : i32
    %c0_i32_0 = arith.constant 0 : i32
    %c0_i32_1 = arith.constant 0 : i32
    return %arg0, %c0_i32, %c0_i32_0 : i32, i32, i32
  }
  func.func @transform_1(%arg0: i32) -> (i32, i32, i32) {
    %c0_i32 = arith.constant 0 : i32
    %c0_i32_0 = arith.constant 0 : i32
    %c0_i32_1 = arith.constant 0 : i32
    return %arg0, %c0_i32, %c0_i32_0 : i32, i32, i32
  }
  func.func @transform_2(%arg0: i32) -> (i32, i32, i32) {
    %c0_i32 = arith.constant 0 : i32
    %c0_i32_0 = arith.constant 0 : i32
    %c0_i32_1 = arith.constant 0 : i32
    return %arg0, %c0_i32, %c0_i32_0 : i32, i32, i32
  }
  func.func @transform_3(%arg0: i32) -> (i32, i32, i32) {
    %c0_i32 = arith.constant 0 : i32
    %c0_i32_0 = arith.constant 0 : i32
    %c0_i32_1 = arith.constant 0 : i32
    return %arg0, %c0_i32, %c0_i32_0 : i32, i32, i32
  }
  func.func @transform_4(%arg0: i32) -> (i32, i32, i32) {
    %c0_i32 = arith.constant 0 : i32
    %c0_i32_0 = arith.constant 0 : i32
    %c0_i32_1 = arith.constant 0 : i32
    return %arg0, %c0_i32, %c0_i32_0 : i32, i32, i32
  }
}

</mosaic_0001>

<llo_original>
// kernel: tpu_custom_call.1
$region0: #{tpu_custom_call.1}
  #allocation0 [shape = 'u32[]', space=smem, size = 0x4, offset = 0x4, fixed_abs, tag = 'smem constant byte address 0x4 - core index']
  #allocation1 [shape = 'u32[144,128]{1,0:T(1,128)}', space=vmem, size = 0x12000, scoped, tag = 'internal scratch']
  %s0 = inlined_call_operand.hbm [shape: f32[8,96,96], index: 0, kind: input, shape index: {}]
  %s1 = inlined_call_operand.hbm [shape: f32[8,96,96], index: 1, kind: input, shape index: {}]
  %s2 = inlined_call_operand.hbm [shape: f32[8,96,96], index: 2, kind: input, shape index: {}]
  %s3 = inlined_call_operand.hbm [shape: s32[8,96,96], index: 3, kind: input, shape index: {}]
  %s4 = inlined_call_operand.hbm [shape: f32[8,96,96], index: 4, kind: output, shape index: {}]
  %s5 = sld [smem:[#allocation0]]
  $region65: #{tpu_custom_call.1} parent=0
    _
  %s7 = ssub.s32 1, %s5
  %s8 = scalar_select 0, %s7, %s5
  $region1: #{tpu_custom_call.1} parent=0
    #allocation2 [shape = 'u8[393216]{0}', space=vmem, size = 0x60000, scoped, tag = 'input window, operand 0']
    #allocation3 [shape = 's32[2]{0}', space=sflag, size = 0x8, scoped, tag = 'scoped memory for tpu_custom_call.1']
    #allocation4 [shape = 's32[2]{0}', space=sflag, size = 0x8, scoped, tag = 'scoped memory for tpu_custom_call.1']
    #allocation5 [shape = 'u8[393216]{0}', space=vmem, size = 0x60000, scoped, tag = 'input window, operand 1']
    #allocation6 [shape = 's32[2]{0}', space=sflag, size = 0x8, scoped, tag = 'scoped memory for tpu_custom_call.1']
    #allocation7 [shape = 'u8[393216]{0}', space=vmem, size = 0x60000, scoped, tag = 'input window, operand 2']
    #allocation8 [shape = 'u8[393216]{0}', space=vmem, size = 0x60000, scoped, tag = 'input window, operand 3']
    #allocation9 [shape = 's32[2]{0}', space=sflag, size = 0x8, scoped, tag = 'scoped memory for tpu_custom_call.1']
    #allocation10 [shape = 'u8[393216]{0}', space=vmem, size = 0x60000, scoped, tag = 'output window, operand 0']
    %9 = vsyncpa [#allocation3], 0
    %s10 = scalar_lea.sflag [#allocation3], 1
    %11 = vsyncpa %s10, 0
    %12 = vsyncpa [#allocation6], 0
    %s13 = scalar_lea.sflag [#allocation6], 1
    %14 = vsyncpa %s13, 0
    %15 = vsyncpa [#allocation9], 0
    %s16 = scalar_lea.sflag [#allocation9], 1
    %17 = vsyncpa %s16, 0
    %18 = vsyncpa [#allocation4], 0
    %s19 = scalar_lea.sflag [#allocation4], 1
    %20 = vsyncpa %s19, 0
    loop: start=0, step=1, limit=4
    $region2: #{tpu_custom_call.1} parent=1 // loop_pre_header
      _
    $region3: #{tpu_custom_call.1} parent=1 // loop_header
      %s22 = sphi 0, %s26
      %p23 = scmp.ge.s32.totalorder %s22, 4
      %s32 = sphi 0, %s34
      %s35 = sphi 0, %s32
      %s36 = sphi 0, %s35
      %s52 = sphi 0, %s36
      %s58 = sphi 0, %s60
      %s61 = sphi 0, %s58
      %s62 = sphi 0, %s61
      %s78 = sphi 0, %s62
      %s84 = sphi 0, %s86
      %s87 = sphi 0, %s84
      %s88 = sphi 0, %s87
      %s104 = sphi 0, %s88
      %s110 = sphi 0, %s112
      %s113 = sphi 0, %s110
      %s114 = sphi 0, %s113
      %s130 = sphi 0, %s114
      %s136 = sphi 0, %s138
      %s139 = sphi 0, %s136
      %s140 = sphi 0, %s139
      %s156 = sphi 0, %s140
    $region4: #{tpu_custom_call.1} parent=1 // loop_header_branch
      %25 = sbr.rel (%p23) target = $region8
    $region5: #{tpu_custom_call.1} parent=1 // loop_body
      %s27 = ssub.s32 %s22, 1
      %s28 = ssub.s32 %s22, 2
      %s29 = sadd.s32 %s22, 1
      %s30 = ssub.s32 %s22, %s29
      %p31 = scmp.eq.s32.totalorder %s30, 0
      %s33 = sadd.s32 %s32, 1
      %s34 = scalar_select %p31, %s32, %s33
      %p37 = pneg %p31
      %p38 = scmp.eq.s32.totalorder %s22, 1
      %p39 = por %p37, %p38
      %p40 = scmp.ne.s32.totalorder %s32, %s35
      %p41 = scmp.eq.s32.totalorder %s22, 0
      %p42 = por %p40, %p41
      %p43 = scmp.ne.s32.totalorder %s32, %s35
      %p44 = scmp.eq.s32.totalorder %s27, 1
      %p45 = por %p43, %p44
      %p46 = scmp.ne.s32.totalorder %s35, %s36
      %p47 = scmp.eq.s32.totalorder %s27, 0
      %p48 = por %p46, %p47
      %p49 = scmp.ne.s32.totalorder %s35, %s36
      %p50 = scmp.eq.s32.totalorder %s28, 1
      %p51 = por %p49, %p50
      %p53 = scmp.ne.s32.totalorder %s36, %s52
      %p54 = scmp.eq.s32.totalorder %s28, 0
      %p55 = por %p53, %p54
      %s56 = ssub.s32 %s22, %s29
      %p57 = scmp.eq.s32.totalorder %s56, 0
      %s59 = sadd.s32 %s58, 1
      %s60 = scalar_select %p57, %s58, %s59
      %p63 = pneg %p57
      %p64 = scmp.eq.s32.totalorder %s22, 1
      %p65 = por %p63, %p64
      %p66 = scmp.ne.s32.totalorder %s58, %s61
      %p67 = scmp.eq.s32.totalorder %s22, 0
      %p68 = por %p66, %p67
      %p69 = scmp.ne.s32.totalorder %s58, %s61
      %p70 = scmp.eq.s32.totalorder %s27, 1
      %p71 = por %p69, %p70
      %p72 = scmp.ne.s32.totalorder %s61, %s62
      %p73 = scmp.eq.s32.totalorder %s27, 0
      %p74 = por %p72, %p73
      %p75 = scmp.ne.s32.totalorder %s61, %s62
      %p76 = scmp.eq.s32.totalorder %s28, 1
      %p77 = por %p75, %p76
      %p79 = scmp.ne.s32.totalorder %s62, %s78
      %p80 = scmp.eq.s32.totalorder %s28, 0
      %p81 = por %p79, %p80
      %s82 = ssub.s32 %s22, %s29
      %p83 = scmp.eq.s32.totalorder %s82, 0
      %s85 = sadd.s32 %s84, 1
      %s86 = scalar_select %p83, %s84, %s85
      %p89 = pneg %p83
      %p90 = scmp.eq.s32.totalorder %s22, 1
      %p91 = por %p89, %p90
      %p92 = scmp.ne.s32.totalorder %s84, %s87
      %p93 = scmp.eq.s32.totalorder %s22, 0
      %p94 = por %p92, %p93
      %p95 = scmp.ne.s32.totalorder %s84, %s87
      %p96 = scmp.eq.s32.totalorder %s27, 1
      %p97 = por %p95, %p96
      %p98 = scmp.ne.s32.totalorder %s87, %s88
      %p99 = scmp.eq.s32.totalorder %s27, 0
      %p100 = por %p98, %p99
      %p101 = scmp.ne.s32.totalorder %s87, %s88
      %p102 = scmp.eq.s32.totalorder %s28, 1
      %p103 = por %p101, %p102
      %p105 = scmp.ne.s32.totalorder %s88, %s104
      %p106 = scmp.eq.s32.totalorder %s28, 0
      %p107 = por %p105, %p106
      %s108 = ssub.s32 %s22, %s29
      %p109 = scmp.eq.s32.totalorder %s108, 0
      %s111 = sadd.s32 %s110, 1
      %s112 = scalar_select %p109, %s110, %s111
      %p115 = pneg %p109
      %p116 = scmp.eq.s32.totalorder %s22, 1
      %p117 = por %p115, %p116
      %p118 = scmp.ne.s32.totalorder %s110, %s113
      %p119 = scmp.eq.s32.totalorder %s22, 0
      %p120 = por %p118, %p119
      %p121 = scmp.ne.s32.totalorder %s110, %s113
      %p122 = scmp.eq.s32.totalorder %s27, 1
      %p123 = por %p121, %p122
      %p124 = scmp.ne.s32.totalorder %s113, %s114
      %p125 = scmp.eq.s32.totalorder %s27, 0
      %p126 = por %p124, %p125
      %p127 = scmp.ne.s32.totalorder %s113, %s114
      %p128 = scmp.eq.s32.totalorder %s28, 1
      %p129 = por %p127, %p128
      %p131 = scmp.ne.s32.totalorder %s114, %s130
      %p132 = scmp.eq.s32.totalorder %s28, 0
      %p133 = por %p131, %p132
      %s134 = ssub.s32 %s22, %s29
      %p135 = scmp.eq.s32.totalorder %s134, 0
      %s137 = sadd.s32 %s136, 1
      %s138 = scalar_select %p135, %s136, %s137
      %p141 = pneg %p135
      %p142 = scmp.eq.s32.totalorder %s22, 1
      %p143 = por %p141, %p142
      %p144 = scmp.ne.s32.totalorder %s136, %s139
      %p145 = scmp.eq.s32.totalorder %s22, 0
      %p146 = por %p144, %p145
      %p147 = scmp.ne.s32.totalorder %s136, %s139
      %p148 = scmp.eq.s32.totalorder %s27, 1
      %p149 = por %p147, %p148
      %p150 = scmp.ne.s32.totalorder %s139, %s140
      %p151 = scmp.eq.s32.totalorder %s27, 0
      %p152 = por %p150, %p151
      %p153 = scmp.ne.s32.totalorder %s139, %s140
      %p154 = scmp.eq.s32.totalorder %s28, 1
      %p155 = por %p153, %p154
      %p157 = scmp.ne.s32.totalorder %s140, %s156
      %p158 = scmp.eq.s32.totalorder %s28, 0
      %p159 = por %p157, %p158
      %p160 = scmp.le.s32.totalorder 1, %s22
      %p161 = scmp.lt.s32.totalorder %s22, 3
      %p162 = pnand %p160, %p161
      %p163 = pneg %p162
      // Predicated region
      $region9: #{tpu_custom_call.1} parent=5 // pred_check
        _
      $region10: #{tpu_custom_call.1} parent=5 // pred_check_branch
        %165 = sbr.rel (%p162) target = $region12
      $region11: #{tpu_custom_call.1} parent=5 // pred_region
        %s166 = ssub.s32 %s22, 1
      $region12: #{tpu_custom_call.1} parent=5 // pred_fallthru
        _
      %p167 = scmp.lt.s32.totalorder %s22, 2
      // Predicated region
      $region13: #{tpu_custom_call.1} parent=5 // pred_check
        %p168 = pneg %p167
      $region14: #{tpu_custom_call.1} parent=5 // pred_check_branch
        %170 = sbr.rel (%p168) target = $region16
      $region15: #{tpu_custom_call.1} parent=5 // pred_region
        // Predicated region
        $region17: #{tpu_custom_call.1} parent=15 // pred_check
          %p171 = pneg %p42
        $region18: #{tpu_custom_call.1} parent=15 // pred_check_branch
          %173 = sbr.rel (%p171) target = $region20
        $region19: #{tpu_custom_call.1} parent=15 // pred_region
          %s174 = sand.u32 %s32, 1
          %s175 = scalar_lea.sflag [#allocation3], %s174
          %s176 = sand.u32 %s32, 1
          %s177 = smul.addr %s176, 384
          %s178 = scalar_lea.vmem [#allocation2], %s177
          %s179 = smul.u32 4, %s22
          %s181 = ssub.s32 6144, 6144
          %182 = vsyncadd %s175, %s181
          %s183 = smul.addr %s179, 12
          %s184 = smul.addr %s183, 128
          %s185 = scalar_lea.hbm %s0, %s184
          %s186 = sshll.u32 %s178, 4
          %s187 = int_to_ptr.vmem [resolvable:$true] %s186
          %192 = dma.hbm_to_vmem [thread:$0]  %s185, 6144, %s187, %s175, 128, 128, 8
        $region20: #{tpu_custom_call.1} parent=15 // pred_fallthru
          _
        // Predicated region
        $region21: #{tpu_custom_call.1} parent=15 // pred_check
          %p193 = pneg %p68
        $region22: #{tpu_custom_call.1} parent=15 // pred_check_branch
          %195 = sbr.rel (%p193) target = $region24
        $region23: #{tpu_custom_call.1} parent=15 // pred_region
          %s196 = sand.u32 %s22, 1
          %s197 = scalar_lea.sflag [#allocation6], %s196
          %s198 = sand.u32 %s58, 1
          %s199 = smul.addr %s198, 384
          %s200 = scalar_lea.vmem [#allocation5], %s199
          %s201 = smul.u32 4, %s22
          %s203 = ssub.s32 6144, 6144
          %204 = vsyncadd %s197, %s203
          %s205 = smul.addr %s201, 12
          %s206 = smul.addr %s205, 128
          %s207 = scalar_lea.hbm %s1, %s206
          %s208 = sshll.u32 %s200, 4
          %s209 = int_to_ptr.vmem [resolvable:$true] %s208
          %214 = dma.hbm_to_vmem [thread:$0]  %s207, 6144, %s209, %s197, 128, 128, 8
        $region24: #{tpu_custom_call.1} parent=15 // pred_fallthru
          _
        // Predicated region
        $region25: #{tpu_custom_call.1} parent=15 // pred_check
          %p215 = pneg %p94
        $region26: #{tpu_custom_call.1} parent=15 // pred_check_branch
          %217 = sbr.rel (%p215) target = $region28
        $region27: #{tpu_custom_call.1} parent=15 // pred_region
          %s218 = sand.u32 %s22, 1
          %s219 = scalar_lea.sflag [#allocation6], %s218
          %s220 = sand.u32 %s84, 1
          %s221 = smul.addr %s220, 384
          %s222 = scalar_lea.vmem [#allocation7], %s221
          %s223 = smul.u32 4, %s22
          %s225 = ssub.s32 6144, 6144
          %226 = vsyncadd %s219, %s225
          %s227 = smul.addr %s223, 12
          %s228 = smul.addr %s227, 128
          %s229 = scalar_lea.hbm %s2, %s228
          %s230 = sshll.u32 %s222, 4
          %s231 = int_to_ptr.vmem [resolvable:$true] %s230
          %236 = dma.hbm_to_vmem [thread:$0]  %s229, 6144, %s231, %s219, 128, 128, 8
        $region28: #{tpu_custom_call.1} parent=15 // pred_fallthru
          _
        // Predicated region
        $region29: #{tpu_custom_call.1} parent=15 // pred_check
          %p237 = pneg %p120
        $region30: #{tpu_custom_call.1} parent=15 // pred_check_branch
          %239 = sbr.rel (%p237) target = $region32
        $region31: #{tpu_custom_call.1} parent=15 // pred_region
          %s240 = sand.u32 %s110, 1
          %s241 = scalar_lea.sflag [#allocation9], %s240
          %s242 = sand.u32 %s110, 1
          %s243 = smul.addr %s242, 384
          %s244 = scalar_lea.vmem [#allocation8], %s243
          %s245 = smul.u32 4, %s22
          %s247 = ssub.s32 6144, 6144
          %248 = vsyncadd %s241, %s247
          %s249 = smul.addr %s245, 12
          %s250 = smul.addr %s249, 128
          %s251 = scalar_lea.hbm %s3, %s250
          %s252 = sshll.u32 %s244, 4
          %s253 = int_to_ptr.vmem [resolvable:$true] %s252
          %258 = dma.hbm_to_vmem [thread:$0]  %s251, 6144, %s253, %s241, 128, 128, 8
        $region32: #{tpu_custom_call.1} parent=15 // pred_fallthru
          _
      $region16: #{tpu_custom_call.1} parent=5 // pred_fallthru
        _
      %p259 = scmp.le.s32.totalorder 1, %s22
      %p260 = scmp.lt.s32.totalorder %s22, 3
      %p261 = pnand %p259, %p260
      %p262 = pneg %p261
      // Predicated region
      $region33: #{tpu_custom_call.1} parent=5 // pred_check
        _
      $region34: #{tpu_custom_call.1} parent=5 // pred_check_branch
        %264 = sbr.rel (%p261) target = $region36
      $region35: #{tpu_custom_call.1} parent=5 // pred_region
        %s265 = ssub.s32 %s22, 1
        %s266 = sand.u32 %s35, 1
        %s267 = scalar_lea.sflag [#allocation3], %s266
        %s268 = sand.u32 %s35, 1
        %s269 = smul.addr %s268, 384
        %s270 = scalar_lea.vmem [#allocation2], %s269
        // Predicated region
        $region37: #{tpu_custom_call.1} parent=35 // pred_check
          %p271 = pneg %p48
        $region38: #{tpu_custom_call.1} parent=35 // pred_check_branch
          %273 = sbr.rel (%p271) target = $region40
        $region39: #{tpu_custom_call.1} parent=35 // pred_region
          %274 = dma.done %s267, 6144
        $region40: #{tpu_custom_call.1} parent=35 // pred_fallthru
          _
        %s275 = sand.u32 %s27, 1
        %s276 = scalar_lea.sflag [#allocation6], %s275
        %s277 = sand.u32 %s61, 1
        %s278 = smul.addr %s277, 384
        %s279 = scalar_lea.vmem [#allocation5], %s278
        // Predicated region
        $region41: #{tpu_custom_call.1} parent=35 // pred_check
          %p280 = pneg %p74
        $region42: #{tpu_custom_call.1} parent=35 // pred_check_branch
          %282 = sbr.rel (%p280) target = $region44
        $region43: #{tpu_custom_call.1} parent=35 // pred_region
          %283 = dma.done %s276, 6144
        $region44: #{tpu_custom_call.1} parent=35 // pred_fallthru
          _
        %s284 = sand.u32 %s27, 1
        %s285 = scalar_lea.sflag [#allocation6], %s284
        %s286 = sand.u32 %s87, 1
        %s287 = smul.addr %s286, 384
        %s288 = scalar_lea.vmem [#allocation7], %s287
        // Predicated region
        $region45: #{tpu_custom_call.1} parent=35 // pred_check
          %p289 = pneg %p100
        $region46: #{tpu_custom_call.1} parent=35 // pred_check_branch
          %291 = sbr.rel (%p289) target = $region48
        $region47: #{tpu_custom_call.1} parent=35 // pred_region
          %292 = dma.done %s285, 6144
        $region48: #{tpu_custom_call.1} parent=35 // pred_fallthru
          _
        %s293 = sand.u32 %s113, 1
        %s294 = scalar_lea.sflag [#allocation9], %s293
        %s295 = sand.u32 %s113, 1
        %s296 = smul.addr %s295, 384
        %s297 = scalar_lea.vmem [#allocation8], %s296
        // Predicated region
        $region49: #{tpu_custom_call.1} parent=35 // pred_check
          %p298 = pneg %p126
        $region50: #{tpu_custom_call.1} parent=35 // pred_check_branch
          %300 = sbr.rel (%p298) target = $region52
        $region51: #{tpu_custom_call.1} parent=35 // pred_region
          %301 = dma.done %s294, 6144
        $region52: #{tpu_custom_call.1} parent=35 // pred_fallthru
          _
        %s302 = sand.u32 %s35, 1
        %s303 = scalar_lea.sflag [#allocation3], %s302
        %s304 = sand.u32 %s35, 1
        %s305 = smul.addr %s304, 384
        %s306 = scalar_lea.vmem [#allocation2], %s305
        %p307 = pneg %p48
        %p308 = pneg %p45
        %s309 = sand.u32 %s27, 1
        %s310 = scalar_lea.sflag [#allocation6], %s309
        %s311 = sand.u32 %s61, 1
        %s312 = smul.addr %s311, 384
        %s313 = scalar_lea.vmem [#allocation5], %s312
        %p314 = pneg %p74
        %p315 = pneg %p71
        %s316 = sand.u32 %s27, 1
        %s317 = scalar_lea.sflag [#allocation6], %s316
        %s318 = sand.u32 %s87, 1
        %s319 = smul.addr %s318, 384
        %s320 = scalar_lea.vmem [#allocation7], %s319
        %p321 = pneg %p100
        %p322 = pneg %p97
        %s323 = sand.u32 %s113, 1
        %s324 = scalar_lea.sflag [#allocation9], %s323
        %s325 = sand.u32 %s113, 1
        %s326 = smul.addr %s325, 384
        %s327 = scalar_lea.vmem [#allocation8], %s326
        %p328 = pneg %p126
        %p329 = pneg %p123
        %p330 = pneg %p152
        %p331 = pneg %p149
        %s332 = sand.u32 %s139, 1
        %s333 = scalar_lea.sflag [#allocation4], %s332
        %s334 = sand.u32 %s139, 1
        %s335 = smul.addr %s334, 384
        %s336 = scalar_lea.vmem [#allocation10], %s335
        %s337 = smul.u32 4, %s27
        %s338 = smul.u32 4, %s27
        %s339 = smul.u32 4, %s27
        %s340 = smul.u32 4, %s27
        %s341 = smul.u32 4, %s27
        %v343 = vld [vmem:[%s270] sm:$0xff]
        %v344 = vld [vmem:[%s270 + $0x8] sm:$0xff]
        %v345 = vld [vmem:[%s270 + $0x10] sm:$0xff]
        %v346 = vld [vmem:[%s270 + $0x18] sm:$0xff]
        %v347 = vld [vmem:[%s270 + $0x20] sm:$0xff]
        %v348 = vld [vmem:[%s270 + $0x28] sm:$0xff]
        %v349 = vld [vmem:[%s270 + $0x30] sm:$0xff]
        %v350 = vld [vmem:[%s270 + $0x38] sm:$0xff]
        %v351 = vld [vmem:[%s270 + $0x40] sm:$0xff]
        %v352 = vld [vmem:[%s270 + $0x48] sm:$0xff]
        %v353 = vld [vmem:[%s270 + $0x50] sm:$0xff]
        %v354 = vld [vmem:[%s270 + $0x58] sm:$0xff]
        %v355 = vld [vmem:[%s270 + $0x60] sm:$0xff]
        %v356 = vld [vmem:[%s270 + $0x68] sm:$0xff]
        %v357 = vld [vmem:[%s270 + $0x70] sm:$0xff]
        %v358 = vld [vmem:[%s270 + $0x78] sm:$0xff]
        %v359 = vld [vmem:[%s270 + $0x80] sm:$0xff]
        %v360 = vld [vmem:[%s270 + $0x88] sm:$0xff]
        %v361 = vld [vmem:[%s270 + $0x90] sm:$0xff]
        %v362 = vld [vmem:[%s270 + $0x98] sm:$0xff]
        %v363 = vld [vmem:[%s270 + $0xa0] sm:$0xff]
        %v364 = vld [vmem:[%s270 + $0xa8] sm:$0xff]
        %v365 = vld [vmem:[%s270 + $0xb0] sm:$0xff]
        %v366 = vld [vmem:[%s270 + $0xb8] sm:$0xff]
        %v367 = vld [vmem:[%s270 + $0xc0] sm:$0xff]
        %v368 = vld [vmem:[%s270 + $0xc8] sm:$0xff]
        %v369 = vld [vmem:[%s270 + $0xd0] sm:$0xff]
        %v370 = vld [vmem:[%s270 + $0xd8] sm:$0xff]
        %v371 = vld [vmem:[%s270 + $0xe0] sm:$0xff]
        %v372 = vld [vmem:[%s270 + $0xe8] sm:$0xff]
        %v373 = vld [vmem:[%s270 + $0xf0] sm:$0xff]
        %v374 = vld [vmem:[%s270 + $0xf8] sm:$0xff]
        %v375 = vld [vmem:[%s270 + $0x100] sm:$0xff]
        %v376 = vld [vmem:[%s270 + $0x108] sm:$0xff]
        %v377 = vld [vmem:[%s270 + $0x110] sm:$0xff]
        %v378 = vld [vmem:[%s270 + $0x118] sm:$0xff]
        %v379 = vld [vmem:[%s270 + $0x120] sm:$0xff]
        %v380 = vld [vmem:[%s270 + $0x128] sm:$0xff]
        %v381 = vld [vmem:[%s270 + $0x130] sm:$0xff]
        %v382 = vld [vmem:[%s270 + $0x138] sm:$0xff]
        %v383 = vld [vmem:[%s270 + $0x140] sm:$0xff]
        %v384 = vld [vmem:[%s270 + $0x148] sm:$0xff]
        %v385 = vld [vmem:[%s270 + $0x150] sm:$0xff]
        %v386 = vld [vmem:[%s270 + $0x158] sm:$0xff]
        %v387 = vld [vmem:[%s270 + $0x160] sm:$0xff]
        %v388 = vld [vmem:[%s270 + $0x168] sm:$0xff]
        %v389 = vld [vmem:[%s270 + $0x170] sm:$0xff]
        %v390 = vld [vmem:[%s270 + $0x178] sm:$0xff]
        %v391 = vpack.c.bf16 %v344, %v343
        %v392 = vpack.c.bf16 %v346, %v345
        %v393 = vpack.c.bf16 %v348, %v347
        %v394 = vpack.c.bf16 %v350, %v349
        %v395 = vpack.c.bf16 %v352, %v351
        %v396 = vpack.c.bf16 %v354, %v353
        %v397 = vpack.c.bf16 %v356, %v355
        %v398 = vpack.c.bf16 %v358, %v357
        %v399 = vpack.c.bf16 %v360, %v359
        %v400 = vpack.c.bf16 %v362, %v361
        %v401 = vpack.c.bf16 %v364, %v363
        %v402 = vpack.c.bf16 %v366, %v365
        %v403 = vpack.c.bf16 %v368, %v367
        %v404 = vpack.c.bf16 %v370, %v369
        %v405 = vpack.c.bf16 %v372, %v371
        %v406 = vpack.c.bf16 %v374, %v373
        %v407 = vpack.c.bf16 %v376, %v375
        %v408 = vpack.c.bf16 %v378, %v377
        %v409 = vpack.c.bf16 %v380, %v379
        %v410 = vpack.c.bf16 %v382, %v381
        %v411 = vpack.c.bf16 %v384, %v383
        %v412 = vpack.c.bf16 %v386, %v385
        %v413 = vpack.c.bf16 %v388, %v387
        %v414 = vpack.c.bf16 %v390, %v389
        %v415 = vld [vmem:[%s279] sm:$0xff]
        %v416 = vld [vmem:[%s279 + $0x8] sm:$0xff]
        %v417 = vld [vmem:[%s279 + $0x10] sm:$0xff]
        %v418 = vld [vmem:[%s279 + $0x18] sm:$0xff]
        %v419 = vld [vmem:[%s279 + $0x20] sm:$0xff]
        %v420 = vld [vmem:[%s279 + $0x28] sm:$0xff]
        %v421 = vld [vmem:[%s279 + $0x30] sm:$0xff]
        %v422 = vld [vmem:[%s279 + $0x38] sm:$0xff]
        %v423 = vld [vmem:[%s279 + $0x40] sm:$0xff]
        %v424 = vld [vmem:[%s279 + $0x48] sm:$0xff]
        %v425 = vld [vmem:[%s279 + $0x50] sm:$0xff]
        %v426 = vld [vmem:[%s279 + $0x58] sm:$0xff]
        %v427 = vld [vmem:[%s279 + $0x60] sm:$0xff]
        %v428 = vld [vmem:[%s279 + $0x68] sm:$0xff]
        %v429 = vld [vmem:[%s279 + $0x70] sm:$0xff]
        %v430 = vld [vmem:[%s279 + $0x78] sm:$0xff]
        %v431 = vld [vmem:[%s279 + $0x80] sm:$0xff]
        %v432 = vld [vmem:[%s279 + $0x88] sm:$0xff]
        %v433 = vld [vmem:[%s279 + $0x90] sm:$0xff]
        %v434 = vld [vmem:[%s279 + $0x98] sm:$0xff]
        %v435 = vld [vmem:[%s279 + $0xa0] sm:$0xff]
        %v436 = vld [vmem:[%s279 + $0xa8] sm:$0xff]
        %v437 = vld [vmem:[%s279 + $0xb0] sm:$0xff]
        %v438 = vld [vmem:[%s279 + $0xb8] sm:$0xff]
        %v439 = vld [vmem:[%s279 + $0xc0] sm:$0xff]
        %v440 = vld [vmem:[%s279 + $0xc8] sm:$0xff]
        %v441 = vld [vmem:[%s279 + $0xd0] sm:$0xff]
        %v442 = vld [vmem:[%s279 + $0xd8] sm:$0xff]
        %v443 = vld [vmem:[%s279 + $0xe0] sm:$0xff]
        %v444 = vld [vmem:[%s279 + $0xe8] sm:$0xff]
        %v445 = vld [vmem:[%s279 + $0xf0] sm:$0xff]
        %v446 = vld [vmem:[%s279 + $0xf8] sm:$0xff]
        %v447 = vld [vmem:[%s279 + $0x100] sm:$0xff]
        %v448 = vld [vmem:[%s279 + $0x108] sm:$0xff]
        %v449 = vld [vmem:[%s279 + $0x110] sm:$0xff]
        %v450 = vld [vmem:[%s279 + $0x118] sm:$0xff]
        %v451 = vld [vmem:[%s279 + $0x120] sm:$0xff]
        %v452 = vld [vmem:[%s279 + $0x128] sm:$0xff]
        %v453 = vld [vmem:[%s279 + $0x130] sm:$0xff]
        %v454 = vld [vmem:[%s279 + $0x138] sm:$0xff]
        %v455 = vld [vmem:[%s279 + $0x140] sm:$0xff]
        %v456 = vld [vmem:[%s279 + $0x148] sm:$0xff]
        %v457 = vld [vmem:[%s279 + $0x150] sm:$0xff]
        %v458 = vld [vmem:[%s279 + $0x158] sm:$0xff]
        %v459 = vld [vmem:[%s279 + $0x160] sm:$0xff]
        %v460 = vld [vmem:[%s279 + $0x168] sm:$0xff]
        %v461 = vld [vmem:[%s279 + $0x170] sm:$0xff]
        %v462 = vld [vmem:[%s279 + $0x178] sm:$0xff]
        %v463 = vpack.c.bf16 %v416, %v415
        %v464 = vpack.c.bf16 %v418, %v417
        %v465 = vpack.c.bf16 %v420, %v419
        %v466 = vpack.c.bf16 %v422, %v421
        %v467 = vpack.c.bf16 %v424, %v423
        %v468 = vpack.c.bf16 %v426, %v425
        %v469 = vpack.c.bf16 %v428, %v427
        %v470 = vpack.c.bf16 %v430, %v429
        %v471 = vpack.c.bf16 %v432, %v431
        %v472 = vpack.c.bf16 %v434, %v433
        %v473 = vpack.c.bf16 %v436, %v435
        %v474 = vpack.c.bf16 %v438, %v437
        %v475 = vpack.c.bf16 %v440, %v439
        %v476 = vpack.c.bf16 %v442, %v441
        %v477 = vpack.c.bf16 %v444, %v443
        %v478 = vpack.c.bf16 %v446, %v445
        %v479 = vpack.c.bf16 %v448, %v447
        %v480 = vpack.c.bf16 %v450, %v449
        %v481 = vpack.c.bf16 %v452, %v451
        %v482 = vpack.c.bf16 %v454, %v453
        %v483 = vpack.c.bf16 %v456, %v455
        %v484 = vpack.c.bf16 %v458, %v457
        %v485 = vpack.c.bf16 %v460, %v459
        %v486 = vpack.c.bf16 %v462, %v461
        %vm487 = vcmask 785408
        %v489 = vsel %vm487, %v391, 0
        %v492 = vsel %vm487, %v392, 0
        %v495 = vsel %vm487, %v393, 0
        %v498 = vsel %vm487, %v394, 0
        %v501 = vsel %vm487, %v395, 0
        %v504 = vsel %vm487, %v396, 0
        %v507 = vsel %vm487, %v463, 0
        %v510 = vsel %vm487, %v464, 0
        %v513 = vsel %vm487, %v465, 0
        %v516 = vsel %vm487, %v466, 0
        %v519 = vsel %vm487, %v467, 0
        %v522 = vsel %vm487, %v468, 0
        %524 = vmatprep.subr.bf16.mxu0 0
        %525 = vmatpush1.bf16.xpose.msra.mxu0 0
        %526 = vmatprep.subr.bf16.mxu0 0
        %527 = vmatpush1.bf16.xpose.msra.mxu0 0
        %528 = vmatprep.subr.bf16.mxu0 0
        %529 = vmatpush1.bf16.xpose.msra.mxu0 %v522
        %530 = vmatprep.subr.bf16.mxu0 0
        %531 = vmatpush1.bf16.xpose.msra.mxu0 %v519
        %532 = vmatprep.subr.bf16.mxu0 0
        %533 = vmatpush1.bf16.xpose.msra.mxu0 %v516
        %534 = vmatprep.subr.bf16.mxu0 0
        %535 = vmatpush1.bf16.xpose.msra.mxu0 %v513
        %536 = vmatprep.subr.bf16.mxu0 0
        %537 = vmatpush1.bf16.xpose.msra.mxu0 %v510
        %538 = vmatprep.subr.bf16.mxu0 0
        %539 = vmatpush1.bf16.xpose.msra.mxu0 %v507
        %540 = vmatprep.subr.bf16.mxu0 0
        %541 = vmatpush2.bf16.xpose.msra.mxu0 0
        %542 = vmatprep.subr.bf16.mxu0 0
        %543 = vmatpush2.bf16.xpose.msra.mxu0 0
        %544 = vmatprep.subr.bf16.mxu0 0
        %545 = vmatpush2.bf16.xpose.msra.mxu0 0
        %546 = vmatprep.subr.bf16.mxu0 0
        %547 = vmatpush2.bf16.xpose.msra.mxu0 0
        %548 = vmatprep.subr.bf16.mxu0 0
        %549 = vmatpush2.bf16.xpose.msra.mxu0 0
        %550 = vmatprep.subr.bf16.mxu0 0
        %551 = vmatpush2.bf16.xpose.msra.mxu0 0
        %552 = vmatprep.subr.bf16.mxu0 0
        %553 = vmatpush2.bf16.xpose.msra.mxu0 0
        %554 = vmatprep.subr.bf16.mxu0 0
        %555 = vmatpush2.bf16.xpose.msra.mxu0 0
        %556 = vmatprep.mubr.bf16.mxu0 0
        %557 = vmatmul.mubr.bf16.gmra.mxu0 %v489
        %v558 = vpop.f32.mrf.mxu0
        %v559 = vadd.f32 0.0, %v558
        %v560 = vpop.f32.mrf.mxu0
        %v561 = vpop.f32.mrf.mxu0
        %v562 = vadd.f32 0.0, %v561
        %v563 = vpop.f32.mrf.mxu0
        %564 = vmatprep.mubr.bf16.mxu0 0
        %565 = vmatmul.mubr.bf16.gmra.mxu0 %v492
        %v566 = vpop.f32.mrf.mxu0
        %v567 = vadd.f32 0.0, %v566
        %v568 = vpop.f32.mrf.mxu0
        %v569 = vpop.f32.mrf.mxu0
        %v570 = vadd.f32 0.0, %v569
        %v571 = vpop.f32.mrf.mxu0
        %572 = vmatprep.mubr.bf16.mxu0 0
        %573 = vmatmul.mubr.bf16.gmra.mxu0 %v495
        %v574 = vpop.f32.mrf.mxu0
        %v575 = vadd.f32 0.0, %v574
        %v576 = vpop.f32.mrf.mxu0
        %v577 = vpop.f32.mrf.mxu0
        %v578 = vadd.f32 0.0, %v577
        %v579 = vpop.f32.mrf.mxu0
        %580 = vmatprep.mubr.bf16.mxu0 0
        %581 = vmatmul.mubr.bf16.gmra.mxu0 %v498
        %v582 = vpop.f32.mrf.mxu0
        %v583 = vadd.f32 0.0, %v582
        %v584 = vpop.f32.mrf.mxu0
        %v585 = vpop.f32.mrf.mxu0
        %v586 = vadd.f32 0.0, %v585
        %v587 = vpop.f32.mrf.mxu0
        %588 = vmatprep.mubr.bf16.mxu0 0
        %589 = vmatmul.mubr.bf16.gmra.mxu0 %v501
        %v590 = vpop.f32.mrf.mxu0
        %v591 = vadd.f32 0.0, %v590
        %v592 = vpop.f32.mrf.mxu0
        %v593 = vpop.f32.mrf.mxu0
        %v594 = vadd.f32 0.0, %v593
        %v595 = vpop.f32.mrf.mxu0
        %596 = vmatprep.mubr.bf16.mxu0 0
        %597 = vmatmul.mubr.bf16.gmra.mxu0 %v504
        %v598 = vpop.f32.mrf.mxu0
        %v599 = vadd.f32 0.0, %v598
        %v600 = vpop.f32.mrf.mxu0
        %v601 = vpop.f32.mrf.mxu0
        %v602 = vadd.f32 0.0, %v601
        %v603 = vpop.f32.mrf.mxu0
        %604 = vdwg.mxu0
        %v606 = vsel %vm487, %v397, 0
        %v609 = vsel %vm487, %v398, 0
        %v612 = vsel %vm487, %v399, 0
        %v615 = vsel %vm487, %v400, 0
        %v618 = vsel %vm487, %v401, 0
        %v621 = vsel %vm487, %v402, 0
        %v624 = vsel %vm487, %v469, 0
        %v627 = vsel %vm487, %v470, 0
        %v630 = vsel %vm487, %v471, 0
        %v633 = vsel %vm487, %v472, 0
        %v636 = vsel %vm487, %v473, 0
        %v639 = vsel %vm487, %v474, 0
        %641 = vmatprep.subr.bf16.mxu0 0
        %642 = vmatpush1.bf16.xpose.msra.mxu0 0
        %643 = vmatprep.subr.bf16.mxu0 0
        %644 = vmatpush1.bf16.xpose.msra.mxu0 0
        %645 = vmatprep.subr.bf16.mxu0 0
        %646 = vmatpush1.bf16.xpose.msra.mxu0 %v639
        %647 = vmatprep.subr.bf16.mxu0 0
        %648 = vmatpush1.bf16.xpose.msra.mxu0 %v636
        %649 = vmatprep.subr.bf16.mxu0 0
        %650 = vmatpush1.bf16.xpose.msra.mxu0 %v633
        %651 = vmatprep.subr.bf16.mxu0 0
        %652 = vmatpush1.bf16.xpose.msra.mxu0 %v630
        %653 = vmatprep.subr.bf16.mxu0 0
        %654 = vmatpush1.bf16.xpose.msra.mxu0 %v627
        %655 = vmatprep.subr.bf16.mxu0 0
        %656 = vmatpush1.bf16.xpose.msra.mxu0 %v624
        %657 = vmatprep.subr.bf16.mxu0 0
        %658 = vmatpush2.bf16.xpose.msra.mxu0 0
        %659 = vmatprep.subr.bf16.mxu0 0
        %660 = vmatpush2.bf16.xpose.msra.mxu0 0
        %661 = vmatprep.subr.bf16.mxu0 0
        %662 = vmatpush2.bf16.xpose.msra.mxu0 0
        %663 = vmatprep.subr.bf16.mxu0 0
        %664 = vmatpush2.bf16.xpose.msra.mxu0 0
        %665 = vmatprep.subr.bf16.mxu0 0
        %666 = vmatpush2.bf16.xpose.msra.mxu0 0
        %667 = vmatprep.subr.bf16.mxu0 0
        %668 = vmatpush2.bf16.xpose.msra.mxu0 0
        %669 = vmatprep.subr.bf16.mxu0 0
        %670 = vmatpush2.bf16.xpose.msra.mxu0 0
        %671 = vmatprep.subr.bf16.mxu0 0
        %672 = vmatpush2.bf16.xpose.msra.mxu0 0
        %673 = vmatprep.mubr.bf16.mxu0 0
        %674 = vmatmul.mubr.bf16.gmra.mxu0 %v606
        %v675 = vpop.f32.mrf.mxu0
        %v676 = vadd.f32 0.0, %v675
        %v677 = vpop.f32.mrf.mxu0
        %v678 = vpop.f32.mrf.mxu0
        %v679 = vadd.f32 0.0, %v678
        %v680 = vpop.f32.mrf.mxu0
        %681 = vmatprep.mubr.bf16.mxu0 0
        %682 = vmatmul.mubr.bf16.gmra.mxu0 %v609
        %v683 = vpop.f32.mrf.mxu0
        %v684 = vadd.f32 0.0, %v683
        %v685 = vpop.f32.mrf.mxu0
        %v686 = vpop.f32.mrf.mxu0
        %v687 = vadd.f32 0.0, %v686
        %v688 = vpop.f32.mrf.mxu0
        %689 = vmatprep.mubr.bf16.mxu0 0
        %690 = vmatmul.mubr.bf16.gmra.mxu0 %v612
        %v691 = vpop.f32.mrf.mxu0
        %v692 = vadd.f32 0.0, %v691
        %v693 = vpop.f32.mrf.mxu0
        %v694 = vpop.f32.mrf.mxu0
        %v695 = vadd.f32 0.0, %v694
        %v696 = vpop.f32.mrf.mxu0
        %697 = vmatprep.mubr.bf16.mxu0 0
        %698 = vmatmul.mubr.bf16.gmra.mxu0 %v615
        %v699 = vpop.f32.mrf.mxu0
        %v700 = vadd.f32 0.0, %v699
        %v701 = vpop.f32.mrf.mxu0
        %v702 = vpop.f32.mrf.mxu0
        %v703 = vadd.f32 0.0, %v702
        %v704 = vpop.f32.mrf.mxu0
        %705 = vmatprep.mubr.bf16.mxu0 0
        %706 = vmatmul.mubr.bf16.gmra.mxu0 %v618
        %v707 = vpop.f32.mrf.mxu0
        %v708 = vadd.f32 0.0, %v707
        %v709 = vpop.f32.mrf.mxu0
        %v710 = vpop.f32.mrf.mxu0
        %v711 = vadd.f32 0.0, %v710
        %v712 = vpop.f32.mrf.mxu0
        %713 = vmatprep.mubr.bf16.mxu0 0
        %714 = vmatmul.mubr.bf16.gmra.mxu0 %v621
        %v715 = vpop.f32.mrf.mxu0
        %v716 = vadd.f32 0.0, %v715
        %v717 = vpop.f32.mrf.mxu0
        %v718 = vpop.f32.mrf.mxu0
        %v719 = vadd.f32 0.0, %v718
        %v720 = vpop.f32.mrf.mxu0
        %721 = vdwg.mxu0
        %v723 = vsel %vm487, %v403, 0
        %v726 = vsel %vm487, %v404, 0
        %v729 = vsel %vm487, %v405, 0
        %v732 = vsel %vm487, %v406, 0
        %v735 = vsel %vm487, %v407, 0
        %v738 = vsel %vm487, %v408, 0
        %v741 = vsel %vm487, %v475, 0
        %v744 = vsel %vm487, %v476, 0
        %v747 = vsel %vm487, %v477, 0
        %v750 = vsel %vm487, %v478, 0
        %v753 = vsel %vm487, %v479, 0
        %v756 = vsel %vm487, %v480, 0
        %758 = vmatprep.subr.bf16.mxu0 0
        %759 = vmatpush1.bf16.xpose.msra.mxu0 0
        %760 = vmatprep.subr.bf16.mxu0 0
        %761 = vmatpush1.bf16.xpose.msra.mxu0 0
        %762 = vmatprep.subr.bf16.mxu0 0
        %763 = vmatpush1.bf16.xpose.msra.mxu0 %v756
        %764 = vmatprep.subr.bf16.mxu0 0
        %765 = vmatpush1.bf16.xpose.msra.mxu0 %v753
        %766 = vmatprep.subr.bf16.mxu0 0
        %767 = vmatpush1.bf16.xpose.msra.mxu0 %v750
        %768 = vmatprep.subr.bf16.mxu0 0
        %769 = vmatpush1.bf16.xpose.msra.mxu0 %v747
        %770 = vmatprep.subr.bf16.mxu0 0
        %771 = vmatpush1.bf16.xpose.msra.mxu0 %v744
        %772 = vmatprep.subr.bf16.mxu0 0
        %773 = vmatpush1.bf16.xpose.msra.mxu0 %v741
        %774 = vmatprep.subr.bf16.mxu0 0
        %775 = vmatpush2.bf16.xpose.msra.mxu0 0
        %776 = vmatprep.subr.bf16.mxu0 0
        %777 = vmatpush2.bf16.xpose.msra.mxu0 0
        %778 = vmatprep.subr.bf16.mxu0 0
        %779 = vmatpush2.bf16.xpose.msra.mxu0 0
        %780 = vmatprep.subr.bf16.mxu0 0
        %781 = vmatpush2.bf16.xpose.msra.mxu0 0
        %782 = vmatprep.subr.bf16.mxu0 0
        %783 = vmatpush2.bf16.xpose.msra.mxu0 0
        %784 = vmatprep.subr.bf16.mxu0 0
        %785 = vmatpush2.bf16.xpose.msra.mxu0 0
        %786 = vmatprep.subr.bf16.mxu0 0
        %787 = vmatpush2.bf16.xpose.msra.mxu0 0
        %788 = vmatprep.subr.bf16.mxu0 0
        %789 = vmatpush2.bf16.xpose.msra.mxu0 0
        %790 = vmatprep.mubr.bf16.mxu0 0
        %791 = vmatmul.mubr.bf16.gmra.mxu0 %v723
        %v792 = vpop.f32.mrf.mxu0
        %v793 = vadd.f32 0.0, %v792
        %v794 = vpop.f32.mrf.mxu0
        %v795 = vpop.f32.mrf.mxu0
        %v796 = vadd.f32 0.0, %v795
        %v797 = vpop.f32.mrf.mxu0
        %798 = vmatprep.mubr.bf16.mxu0 0
        %799 = vmatmul.mubr.bf16.gmra.mxu0 %v726
        %v800 = vpop.f32.mrf.mxu0
        %v801 = vadd.f32 0.0, %v800
        %v802 = vpop.f32.mrf.mxu0
        %v803 = vpop.f32.mrf.mxu0
        %v804 = vadd.f32 0.0, %v803
        %v805 = vpop.f32.mrf.mxu0
        %806 = vmatprep.mubr.bf16.mxu0 0
        %807 = vmatmul.mubr.bf16.gmra.mxu0 %v729
        %v808 = vpop.f32.mrf.mxu0
        %v809 = vadd.f32 0.0, %v808
        %v810 = vpop.f32.mrf.mxu0
        %v811 = vpop.f32.mrf.mxu0
        %v812 = vadd.f32 0.0, %v811
        %v813 = vpop.f32.mrf.mxu0
        %814 = vmatprep.mubr.bf16.mxu0 0
        %815 = vmatmul.mubr.bf16.gmra.mxu0 %v732
        %v816 = vpop.f32.mrf.mxu0
        %v817 = vadd.f32 0.0, %v816
        %v818 = vpop.f32.mrf.mxu0
        %v819 = vpop.f32.mrf.mxu0
        %v820 = vadd.f32 0.0, %v819
        %v821 = vpop.f32.mrf.mxu0
        %822 = vmatprep.mubr.bf16.mxu0 0
        %823 = vmatmul.mubr.bf16.gmra.mxu0 %v735
        %v824 = vpop.f32.mrf.mxu0
        %v825 = vadd.f32 0.0, %v824
        %v826 = vpop.f32.mrf.mxu0
        %v827 = vpop.f32.mrf.mxu0
        %v828 = vadd.f32 0.0, %v827
        %v829 = vpop.f32.mrf.mxu0
        %830 = vmatprep.mubr.bf16.mxu0 0
        %831 = vmatmul.mubr.bf16.gmra.mxu0 %v738
        %v832 = vpop.f32.mrf.mxu0
        %v833 = vadd.f32 0.0, %v832
        %v834 = vpop.f32.mrf.mxu0
        %v835 = vpop.f32.mrf.mxu0
        %v836 = vadd.f32 0.0, %v835
        %v837 = vpop.f32.mrf.mxu0
        %838 = vdwg.mxu0
        %v840 = vsel %vm487, %v409, 0
        %v843 = vsel %vm487, %v410, 0
        %v846 = vsel %vm487, %v411, 0
        %v849 = vsel %vm487, %v412, 0
        %v852 = vsel %vm487, %v413, 0
        %v855 = vsel %vm487, %v414, 0
        %v858 = vsel %vm487, %v481, 0
        %v861 = vsel %vm487, %v482, 0
        %v864 = vsel %vm487, %v483, 0
        %v867 = vsel %vm487, %v484, 0
        %v870 = vsel %vm487, %v485, 0
        %v873 = vsel %vm487, %v486, 0
        %875 = vmatprep.subr.bf16.mxu0 0
        %876 = vmatpush1.bf16.xpose.msra.mxu0 0
        %877 = vmatprep.subr.bf16.mxu0 0
        %878 = vmatpush1.bf16.xpose.msra.mxu0 0
        %879 = vmatprep.subr.bf16.mxu0 0
        %880 = vmatpush1.bf16.xpose.msra.mxu0 %v873
        %881 = vmatprep.subr.bf16.mxu0 0
        %882 = vmatpush1.bf16.xpose.msra.mxu0 %v870
        %883 = vmatprep.subr.bf16.mxu0 0
        %884 = vmatpush1.bf16.xpose.msra.mxu0 %v867
        %885 = vmatprep.subr.bf16.mxu0 0
        %886 = vmatpush1.bf16.xpose.msra.mxu0 %v864
        %887 = vmatprep.subr.bf16.mxu0 0
        %888 = vmatpush1.bf16.xpose.msra.mxu0 %v861
        %889 = vmatprep.subr.bf16.mxu0 0
        %890 = vmatpush1.bf16.xpose.msra.mxu0 %v858
        %891 = vmatprep.subr.bf16.mxu0 0
        %892 = vmatpush2.bf16.xpose.msra.mxu0 0
        %893 = vmatprep.subr.bf16.mxu0 0
        %894 = vmatpush2.bf16.xpose.msra.mxu0 0
        %895 = vmatprep.subr.bf16.mxu0 0
        %896 = vmatpush2.bf16.xpose.msra.mxu0 0
        %897 = vmatprep.subr.bf16.mxu0 0
        %898 = vmatpush2.bf16.xpose.msra.mxu0 0
        %899 = vmatprep.subr.bf16.mxu0 0
        %900 = vmatpush2.bf16.xpose.msra.mxu0 0
        %901 = vmatprep.subr.bf16.mxu0 0
        %902 = vmatpush2.bf16.xpose.msra.mxu0 0
        %903 = vmatprep.subr.bf16.mxu0 0
        %904 = vmatpush2.bf16.xpose.msra.mxu0 0
        %905 = vmatprep.subr.bf16.mxu0 0
        %906 = vmatpush2.bf16.xpose.msra.mxu0 0
        %907 = vmatprep.mubr.bf16.mxu0 0
        %908 = vmatmul.mubr.bf16.gmra.mxu0 %v840
        %v909 = vpop.f32.mrf.mxu0
        %v910 = vadd.f32 0.0, %v909
        %v911 = vpop.f32.mrf.mxu0
        %v912 = vpop.f32.mrf.mxu0
        %v913 = vadd.f32 0.0, %v912
        %v914 = vpop.f32.mrf.mxu0
        %915 = vmatprep.mubr.bf16.mxu0 0
        %916 = vmatmul.mubr.bf16.gmra.mxu0 %v843
        %v917 = vpop.f32.mrf.mxu0
        %v918 = vadd.f32 0.0, %v917
        %v919 = vpop.f32.mrf.mxu0
        %v920 = vpop.f32.mrf.mxu0
        %v921 = vadd.f32 0.0, %v920
        %v922 = vpop.f32.mrf.mxu0
        %923 = vmatprep.mubr.bf16.mxu0 0
        %924 = vmatmul.mubr.bf16.gmra.mxu0 %v846
        %v925 = vpop.f32.mrf.mxu0
        %v926 = vadd.f32 0.0, %v925
        %v927 = vpop.f32.mrf.mxu0
        %v928 = vpop.f32.mrf.mxu0
        %v929 = vadd.f32 0.0, %v928
        %v930 = vpop.f32.mrf.mxu0
        %931 = vmatprep.mubr.bf16.mxu0 0
        %932 = vmatmul.mubr.bf16.gmra.mxu0 %v849
        %v933 = vpop.f32.mrf.mxu0
        %v934 = vadd.f32 0.0, %v933
        %v935 = vpop.f32.mrf.mxu0
        %v936 = vpop.f32.mrf.mxu0
        %v937 = vadd.f32 0.0, %v936
        %v938 = vpop.f32.mrf.mxu0
        %939 = vmatprep.mubr.bf16.mxu0 0
        %940 = vmatmul.mubr.bf16.gmra.mxu0 %v852
        %v941 = vpop.f32.mrf.mxu0
        %v942 = vadd.f32 0.0, %v941
        %v943 = vpop.f32.mrf.mxu0
        %v944 = vpop.f32.mrf.mxu0
        %v945 = vadd.f32 0.0, %v944
        %v946 = vpop.f32.mrf.mxu0
        %947 = vmatprep.mubr.bf16.mxu0 0
        %948 = vmatmul.mubr.bf16.gmra.mxu0 %v855
        %v949 = vpop.f32.mrf.mxu0
        %v950 = vadd.f32 0.0, %v949
        %v951 = vpop.f32.mrf.mxu0
        %v952 = vpop.f32.mrf.mxu0
        %v953 = vadd.f32 0.0, %v952
        %v954 = vpop.f32.mrf.mxu0
        %955 = vdwg.mxu0
        %v956 = vld [vmem:[%s297] sm:$0xff]
        %v957 = vld [vmem:[%s297 + $0x8] sm:$0xff]
        %v958 = vld [vmem:[%s297 + $0x10] sm:$0xff]
        %v959 = vld [vmem:[%s297 + $0x18] sm:$0xff]
        %v960 = vld [vmem:[%s297 + $0x20] sm:$0xff]
        %v961 = vld [vmem:[%s297 + $0x28] sm:$0xff]
        %v962 = vld [vmem:[%s297 + $0x30] sm:$0xff]
        %v963 = vld [vmem:[%s297 + $0x38] sm:$0xff]
        %v964 = vld [vmem:[%s297 + $0x40] sm:$0xff]
        %v965 = vld [vmem:[%s297 + $0x48] sm:$0xff]
        %v966 = vld [vmem:[%s297 + $0x50] sm:$0xff]
        %v967 = vld [vmem:[%s297 + $0x58] sm:$0xff]
        %v968 = vld [vmem:[%s297 + $0x60] sm:$0xff]
        %v969 = vld [vmem:[%s297 + $0x68] sm:$0xff]
        %v970 = vld [vmem:[%s297 + $0x70] sm:$0xff]
        %v971 = vld [vmem:[%s297 + $0x78] sm:$0xff]
        %v972 = vld [vmem:[%s297 + $0x80] sm:$0xff]
        %v973 = vld [vmem:[%s297 + $0x88] sm:$0xff]
        %v974 = vld [vmem:[%s297 + $0x90] sm:$0xff]
        %v975 = vld [vmem:[%s297 + $0x98] sm:$0xff]
        %v976 = vld [vmem:[%s297 + $0xa0] sm:$0xff]
        %v977 = vld [vmem:[%s297 + $0xa8] sm:$0xff]
        %v978 = vld [vmem:[%s297 + $0xb0] sm:$0xff]
        %v979 = vld [vmem:[%s297 + $0xb8] sm:$0xff]
        %v980 = vld [vmem:[%s297 + $0xc0] sm:$0xff]
        %v981 = vld [vmem:[%s297 + $0xc8] sm:$0xff]
        %v982 = vld [vmem:[%s297 + $0xd0] sm:$0xff]
        %v983 = vld [vmem:[%s297 + $0xd8] sm:$0xff]
        %v984 = vld [vmem:[%s297 + $0xe0] sm:$0xff]
        %v985 = vld [vmem:[%s297 + $0xe8] sm:$0xff]
        %v986 = vld [vmem:[%s297 + $0xf0] sm:$0xff]
        %v987 = vld [vmem:[%s297 + $0xf8] sm:$0xff]
        %v988 = vld [vmem:[%s297 + $0x100] sm:$0xff]
        %v989 = vld [vmem:[%s297 + $0x108] sm:$0xff]
        %v990 = vld [vmem:[%s297 + $0x110] sm:$0xff]
        %v991 = vld [vmem:[%s297 + $0x118] sm:$0xff]
        %v992 = vld [vmem:[%s297 + $0x120] sm:$0xff]
        %v993 = vld [vmem:[%s297 + $0x128] sm:$0xff]
        %v994 = vld [vmem:[%s297 + $0x130] sm:$0xff]
        %v995 = vld [vmem:[%s297 + $0x138] sm:$0xff]
        %v996 = vld [vmem:[%s297 + $0x140] sm:$0xff]
        %v997 = vld [vmem:[%s297 + $0x148] sm:$0xff]
        %v998 = vld [vmem:[%s297 + $0x150] sm:$0xff]
        %v999 = vld [vmem:[%s297 + $0x158] sm:$0xff]
        %v1000 = vld [vmem:[%s297 + $0x160] sm:$0xff]
        %v1001 = vld [vmem:[%s297 + $0x168] sm:$0xff]
        %v1002 = vld [vmem:[%s297 + $0x170] sm:$0xff]
        %v1003 = vld [vmem:[%s297 + $0x178] sm:$0xff]
        %vm1004 = vcmp.ge.s32.totalorder %v956, 214748365
        %vm1005 = vcmp.ge.s32.totalorder %v957, 214748365
        %vm1006 = vcmp.ge.s32.totalorder %v958, 214748365
        %vm1007 = vcmp.ge.s32.totalorder %v959, 214748365
        %vm1008 = vcmp.ge.s32.totalorder %v960, 214748365
        %vm1009 = vcmp.ge.s32.totalorder %v961, 214748365
        %vm1010 = vcmp.ge.s32.totalorder %v962, 214748365
        %vm1011 = vcmp.ge.s32.totalorder %v963, 214748365
        %vm1012 = vcmp.ge.s32.totalorder %v964, 214748365
        %vm1013 = vcmp.ge.s32.totalorder %v965, 214748365
        %vm1014 = vcmp.ge.s32.totalorder %v966, 214748365
        %vm1015 = vcmp.ge.s32.totalorder %v967, 214748365
        %vm1016 = vcmp.ge.s32.totalorder %v968, 214748365
        %vm1017 = vcmp.ge.s32.totalorder %v969, 214748365
        %vm1018 = vcmp.ge.s32.totalorder %v970, 214748365
        %vm1019 = vcmp.ge.s32.totalorder %v971, 214748365
        %vm1020 = vcmp.ge.s32.totalorder %v972, 214748365
        %vm1021 = vcmp.ge.s32.totalorder %v973, 214748365
        %vm1022 = vcmp.ge.s32.totalorder %v974, 214748365
        %vm1023 = vcmp.ge.s32.totalorder %v975, 214748365
        %vm1024 = vcmp.ge.s32.totalorder %v976, 214748365
        %vm1025 = vcmp.ge.s32.totalorder %v977, 214748365
        %vm1026 = vcmp.ge.s32.totalorder %v978, 214748365
        %vm1027 = vcmp.ge.s32.totalorder %v979, 214748365
        %vm1028 = vcmp.ge.s32.totalorder %v980, 214748365
        %vm1029 = vcmp.ge.s32.totalorder %v981, 214748365
        %vm1030 = vcmp.ge.s32.totalorder %v982, 214748365
        %vm1031 = vcmp.ge.s32.totalorder %v983, 214748365
        %vm1032 = vcmp.ge.s32.totalorder %v984, 214748365
        %vm1033 = vcmp.ge.s32.totalorder %v985, 214748365
        %vm1034 = vcmp.ge.s32.totalorder %v986, 214748365
        %vm1035 = vcmp.ge.s32.totalorder %v987, 214748365
        %vm1036 = vcmp.ge.s32.totalorder %v988, 214748365
        %vm1037 = vcmp.ge.s32.totalorder %v989, 214748365
        %vm1038 = vcmp.ge.s32.totalorder %v990, 214748365
        %vm1039 = vcmp.ge.s32.totalorder %v991, 214748365
        %vm1040 = vcmp.ge.s32.totalorder %v992, 214748365
        %vm1041 = vcmp.ge.s32.totalorder %v993, 214748365
        %vm1042 = vcmp.ge.s32.totalorder %v994, 214748365
        %vm1043 = vcmp.ge.s32.totalorder %v995, 214748365
        %vm1044 = vcmp.ge.s32.totalorder %v996, 214748365
        %vm1045 = vcmp.ge.s32.totalorder %v997, 214748365
        %vm1046 = vcmp.ge.s32.totalorder %v998, 214748365
        %vm1047 = vcmp.ge.s32.totalorder %v999, 214748365
        %vm1048 = vcmp.ge.s32.totalorder %v1000, 214748365
        %vm1049 = vcmp.ge.s32.totalorder %v1001, 214748365
        %vm1050 = vcmp.ge.s32.totalorder %v1002, 214748365
        %vm1051 = vcmp.ge.s32.totalorder %v1003, 214748365
        %v1052 = vmul.f32 %v559, 1.1111112
        %v1053 = vmul.f32 %v562, 1.1111112
        %v1054 = vmul.f32 %v567, 1.1111112
        %v1055 = vmul.f32 %v570, 1.1111112
        %v1056 = vmul.f32 %v575, 1.1111112
        %v1057 = vmul.f32 %v578, 1.1111112
        %v1058 = vmul.f32 %v583, 1.1111112
        %v1059 = vmul.f32 %v586, 1.1111112
        %v1060 = vmul.f32 %v591, 1.1111112
        %v1061 = vmul.f32 %v594, 1.1111112
        %v1062 = vmul.f32 %v599, 1.1111112
        %v1063 = vmul.f32 %v602, 1.1111112
        %v1064 = vmul.f32 %v676, 1.1111112
        %v1065 = vmul.f32 %v679, 1.1111112
        %v1066 = vmul.f32 %v684, 1.1111112
        %v1067 = vmul.f32 %v687, 1.1111112
        %v1068 = vmul.f32 %v692, 1.1111112
        %v1069 = vmul.f32 %v695, 1.1111112
        %v1070 = vmul.f32 %v700, 1.1111112
        %v1071 = vmul.f32 %v703, 1.1111112
        %v1072 = vmul.f32 %v708, 1.1111112
        %v1073 = vmul.f32 %v711, 1.1111112
        %v1074 = vmul.f32 %v716, 1.1111112
        %v1075 = vmul.f32 %v719, 1.1111112
        %v1076 = vmul.f32 %v793, 1.1111112
        %v1077 = vmul.f32 %v796, 1.1111112
        %v1078 = vmul.f32 %v801, 1.1111112
        %v1079 = vmul.f32 %v804, 1.1111112
        %v1080 = vmul.f32 %v809, 1.1111112
        %v1081 = vmul.f32 %v812, 1.1111112
        %v1082 = vmul.f32 %v817, 1.1111112
        %v1083 = vmul.f32 %v820, 1.1111112
        %v1084 = vmul.f32 %v825, 1.1111112
        %v1085 = vmul.f32 %v828, 1.1111112
        %v1086 = vmul.f32 %v833, 1.1111112
        %v1087 = vmul.f32 %v836, 1.1111112
        %v1088 = vmul.f32 %v910, 1.1111112
        %v1089 = vmul.f32 %v913, 1.1111112
        %v1090 = vmul.f32 %v918, 1.1111112
        %v1091 = vmul.f32 %v921, 1.1111112
        %v1092 = vmul.f32 %v926, 1.1111112
        %v1093 = vmul.f32 %v929, 1.1111112
        %v1094 = vmul.f32 %v934, 1.1111112
        %v1095 = vmul.f32 %v937, 1.1111112
        %v1096 = vmul.f32 %v942, 1.1111112
        %v1097 = vmul.f32 %v945, 1.1111112
        %v1098 = vmul.f32 %v950, 1.1111112
        %v1099 = vmul.f32 %v953, 1.1111112
        %v1100 = vsel %vm1004, %v1052, 0.0
        %v1101 = vsel %vm1005, %v1053, 0.0
        %v1102 = vsel %vm1006, %v1054, 0.0
        %v1103 = vsel %vm1007, %v1055, 0.0
        %v1104 = vsel %vm1008, %v1056, 0.0
        %v1105 = vsel %vm1009, %v1057, 0.0
        %v1106 = vsel %vm1010, %v1058, 0.0
        %v1107 = vsel %vm1011, %v1059, 0.0
        %v1108 = vsel %vm1012, %v1060, 0.0
        %v1109 = vsel %vm1013, %v1061, 0.0
        %v1110 = vsel %vm1014, %v1062, 0.0
        %v1111 = vsel %vm1015, %v1063, 0.0
        %v1112 = vsel %vm1016, %v1064, 0.0
        %v1113 = vsel %vm1017, %v1065, 0.0
        %v1114 = vsel %vm1018, %v1066, 0.0
        %v1115 = vsel %vm1019, %v1067, 0.0
        %v1116 = vsel %vm1020, %v1068, 0.0
        %v1117 = vsel %vm1021, %v1069, 0.0
        %v1118 = vsel %vm1022, %v1070, 0.0
        %v1119 = vsel %vm1023, %v1071, 0.0
        %v1120 = vsel %vm1024, %v1072, 0.0
        %v1121 = vsel %vm1025, %v1073, 0.0
        %v1122 = vsel %vm1026, %v1074, 0.0
        %v1123 = vsel %vm1027, %v1075, 0.0
        %v1124 = vsel %vm1028, %v1076, 0.0
        %v1125 = vsel %vm1029, %v1077, 0.0
        %v1126 = vsel %vm1030, %v1078, 0.0
        %v1127 = vsel %vm1031, %v1079, 0.0
        %v1128 = vsel %vm1032, %v1080, 0.0
        %v1129 = vsel %vm1033, %v1081, 0.0
        %v1130 = vsel %vm1034, %v1082, 0.0
        %v1131 = vsel %vm1035, %v1083, 0.0
        %v1132 = vsel %vm1036, %v1084, 0.0
        %v1133 = vsel %vm1037, %v1085, 0.0
        %v1134 = vsel %vm1038, %v1086, 0.0
        %v1135 = vsel %vm1039, %v1087, 0.0
        %v1136 = vsel %vm1040, %v1088, 0.0
        %v1137 = vsel %vm1041, %v1089, 0.0
        %v1138 = vsel %vm1042, %v1090, 0.0
        %v1139 = vsel %vm1043, %v1091, 0.0
        %v1140 = vsel %vm1044, %v1092, 0.0
        %v1141 = vsel %vm1045, %v1093, 0.0
        %v1142 = vsel %vm1046, %v1094, 0.0
        %v1143 = vsel %vm1047, %v1095, 0.0
        %v1144 = vsel %vm1048, %v1096, 0.0
        %v1145 = vsel %vm1049, %v1097, 0.0
        %v1146 = vsel %vm1050, %v1098, 0.0
        %v1147 = vsel %vm1051, %v1099, 0.0
        %v1148 = vpack.c.bf16 %v1101, %v1100
        %v1149 = vpack.c.bf16 %v1103, %v1102
        %v1150 = vpack.c.bf16 %v1105, %v1104
        %v1151 = vpack.c.bf16 %v1107, %v1106
        %v1152 = vpack.c.bf16 %v1109, %v1108
        %v1153 = vpack.c.bf16 %v1111, %v1110
        %v1154 = vpack.c.bf16 %v1113, %v1112
        %v1155 = vpack.c.bf16 %v1115, %v1114
        %v1156 = vpack.c.bf16 %v1117, %v1116
        %v1157 = vpack.c.bf16 %v1119, %v1118
        %v1158 = vpack.c.bf16 %v1121, %v1120
        %v1159 = vpack.c.bf16 %v1123, %v1122
        %v1160 = vpack.c.bf16 %v1125, %v1124
        %v1161 = vpack.c.bf16 %v1127, %v1126
        %v1162 = vpack.c.bf16 %v1129, %v1128
        %v1163 = vpack.c.bf16 %v1131, %v1130
        %v1164 = vpack.c.bf16 %v1133, %v1132
        %v1165 = vpack.c.bf16 %v1135, %v1134
        %v1166 = vpack.c.bf16 %v1137, %v1136
        %v1167 = vpack.c.bf16 %v1139, %v1138
        %v1168 = vpack.c.bf16 %v1141, %v1140
        %v1169 = vpack.c.bf16 %v1143, %v1142
        %v1170 = vpack.c.bf16 %v1145, %v1144
        %v1171 = vpack.c.bf16 %v1147, %v1146
        %v1172 = vld [vmem:[%s288] sm:$0xff]
        %v1173 = vld [vmem:[%s288 + $0x8] sm:$0xff]
        %v1174 = vld [vmem:[%s288 + $0x10] sm:$0xff]
        %v1175 = vld [vmem:[%s288 + $0x18] sm:$0xff]
        %v1176 = vld [vmem:[%s288 + $0x20] sm:$0xff]
        %v1177 = vld [vmem:[%s288 + $0x28] sm:$0xff]
        %v1178 = vld [vmem:[%s288 + $0x30] sm:$0xff]
        %v1179 = vld [vmem:[%s288 + $0x38] sm:$0xff]
        %v1180 = vld [vmem:[%s288 + $0x40] sm:$0xff]
        %v1181 = vld [vmem:[%s288 + $0x48] sm:$0xff]
        %v1182 = vld [vmem:[%s288 + $0x50] sm:$0xff]
        %v1183 = vld [vmem:[%s288 + $0x58] sm:$0xff]
        %v1184 = vld [vmem:[%s288 + $0x60] sm:$0xff]
        %v1185 = vld [vmem:[%s288 + $0x68] sm:$0xff]
        %v1186 = vld [vmem:[%s288 + $0x70] sm:$0xff]
        %v1187 = vld [vmem:[%s288 + $0x78] sm:$0xff]
        %v1188 = vld [vmem:[%s288 + $0x80] sm:$0xff]
        %v1189 = vld [vmem:[%s288 + $0x88] sm:$0xff]
        %v1190 = vld [vmem:[%s288 + $0x90] sm:$0xff]
        %v1191 = vld [vmem:[%s288 + $0x98] sm:$0xff]
        %v1192 = vld [vmem:[%s288 + $0xa0] sm:$0xff]
        %v1193 = vld [vmem:[%s288 + $0xa8] sm:$0xff]
        %v1194 = vld [vmem:[%s288 + $0xb0] sm:$0xff]
        %v1195 = vld [vmem:[%s288 + $0xb8] sm:$0xff]
        %v1196 = vld [vmem:[%s288 + $0xc0] sm:$0xff]
        %v1197 = vld [vmem:[%s288 + $0xc8] sm:$0xff]
        %v1198 = vld [vmem:[%s288 + $0xd0] sm:$0xff]
        %v1199 = vld [vmem:[%s288 + $0xd8] sm:$0xff]
        %v1200 = vld [vmem:[%s288 + $0xe0] sm:$0xff]
        %v1201 = vld [vmem:[%s288 + $0xe8] sm:$0xff]
        %v1202 = vld [vmem:[%s288 + $0xf0] sm:$0xff]
        %v1203 = vld [vmem:[%s288 + $0xf8] sm:$0xff]
        %v1204 = vld [vmem:[%s288 + $0x100] sm:$0xff]
        %v1205 = vld [vmem:[%s288 + $0x108] sm:$0xff]
        %v1206 = vld [vmem:[%s288 + $0x110] sm:$0xff]
        %v1207 = vld [vmem:[%s288 + $0x118] sm:$0xff]
        %v1208 = vld [vmem:[%s288 + $0x120] sm:$0xff]
        %v1209 = vld [vmem:[%s288 + $0x128] sm:$0xff]
        %v1210 = vld [vmem:[%s288 + $0x130] sm:$0xff]
        %v1211 = vld [vmem:[%s288 + $0x138] sm:$0xff]
        %v1212 = vld [vmem:[%s288 + $0x140] sm:$0xff]
        %v1213 = vld [vmem:[%s288 + $0x148] sm:$0xff]
        %v1214 = vld [vmem:[%s288 + $0x150] sm:$0xff]
        %v1215 = vld [vmem:[%s288 + $0x158] sm:$0xff]
        %v1216 = vld [vmem:[%s288 + $0x160] sm:$0xff]
        %v1217 = vld [vmem:[%s288 + $0x168] sm:$0xff]
        %v1218 = vld [vmem:[%s288 + $0x170] sm:$0xff]
        %v1219 = vld [vmem:[%s288 + $0x178] sm:$0xff]
        %v1220 = vpack.c.bf16 %v1173, %v1172
        %v1221 = vpack.c.bf16 %v1175, %v1174
        %v1222 = vpack.c.bf16 %v1177, %v1176
        %v1223 = vpack.c.bf16 %v1179, %v1178
        %v1224 = vpack.c.bf16 %v1181, %v1180
        %v1225 = vpack.c.bf16 %v1183, %v1182
        %v1226 = vpack.c.bf16 %v1185, %v1184
        %v1227 = vpack.c.bf16 %v1187, %v1186
        %v1228 = vpack.c.bf16 %v1189, %v1188
        %v1229 = vpack.c.bf16 %v1191, %v1190
        %v1230 = vpack.c.bf16 %v1193, %v1192
        %v1231 = vpack.c.bf16 %v1195, %v1194
        %v1232 = vpack.c.bf16 %v1197, %v1196
        %v1233 = vpack.c.bf16 %v1199, %v1198
        %v1234 = vpack.c.bf16 %v1201, %v1200
        %v1235 = vpack.c.bf16 %v1203, %v1202
        %v1236 = vpack.c.bf16 %v1205, %v1204
        %v1237 = vpack.c.bf16 %v1207, %v1206
        %v1238 = vpack.c.bf16 %v1209, %v1208
        %v1239 = vpack.c.bf16 %v1211, %v1210
        %v1240 = vpack.c.bf16 %v1213, %v1212
        %v1241 = vpack.c.bf16 %v1215, %v1214
        %v1242 = vpack.c.bf16 %v1217, %v1216
        %v1243 = vpack.c.bf16 %v1219, %v1218
        %v1245 = vsel %vm487, %v1148, 0
        %v1248 = vsel %vm487, %v1149, 0
        %v1251 = vsel %vm487, %v1150, 0
        %v1254 = vsel %vm487, %v1151, 0
        %v1257 = vsel %vm487, %v1152, 0
        %v1260 = vsel %vm487, %v1153, 0
        %1262 = vmatprep.subr.bf16.mxu0 0
        %1263 = vmatpush1.bf16.msra.mxu0 0
        %1264 = vmatprep.subr.bf16.mxu0 0
        %1265 = vmatpush1.bf16.msra.mxu0 0
        %1266 = vmatprep.subr.bf16.mxu0 0
        %1267 = vmatpush1.bf16.msra.mxu0 %v1225
        %1268 = vmatprep.subr.bf16.mxu0 0
        %1269 = vmatpush1.bf16.msra.mxu0 %v1224
        %1270 = vmatprep.subr.bf16.mxu0 0
        %1271 = vmatpush1.bf16.msra.mxu0 %v1223
        %1272 = vmatprep.subr.bf16.mxu0 0
        %1273 = vmatpush1.bf16.msra.mxu0 %v1222
        %1274 = vmatprep.subr.bf16.mxu0 0
        %1275 = vmatpush1.bf16.msra.mxu0 %v1221
        %1276 = vmatprep.subr.bf16.mxu0 0
        %1277 = vmatpush1.bf16.msra.mxu0 %v1220
        %1278 = vmatprep.subr.bf16.mxu0 0
        %1279 = vmatpush2.bf16.msra.mxu0 0
        %1280 = vmatprep.subr.bf16.mxu0 0
        %1281 = vmatpush2.bf16.msra.mxu0 0
        %1282 = vmatprep.subr.bf16.mxu0 0
        %1283 = vmatpush2.bf16.msra.mxu0 0
        %1284 = vmatprep.subr.bf16.mxu0 0
        %1285 = vmatpush2.bf16.msra.mxu0 0
        %1286 = vmatprep.subr.bf16.mxu0 0
        %1287 = vmatpush2.bf16.msra.mxu0 0
        %1288 = vmatprep.subr.bf16.mxu0 0
        %1289 = vmatpush2.bf16.msra.mxu0 0
        %1290 = vmatprep.subr.bf16.mxu0 0
        %1291 = vmatpush2.bf16.msra.mxu0 0
        %1292 = vmatprep.subr.bf16.mxu0 0
        %1293 = vmatpush2.bf16.msra.mxu0 0
        %1294 = vmatprep.mubr.bf16.mxu0 0
        %1295 = vmatmul.mubr.bf16.gmra.mxu0 %v1245
        %v1296 = vpop.f32.mrf.mxu0
        %v1297 = vadd.f32 0.0, %v1296
        %v1298 = vpop.f32.mrf.mxu0
        %v1299 = vpop.f32.mrf.mxu0
        %v1300 = vadd.f32 0.0, %v1299
        %v1301 = vpop.f32.mrf.mxu0
        %1302 = vmatprep.mubr.bf16.mxu0 0
        %1303 = vmatmul.mubr.bf16.gmra.mxu0 %v1248
        %v1304 = vpop.f32.mrf.mxu0
        %v1305 = vadd.f32 0.0, %v1304
        %v1306 = vpop.f32.mrf.mxu0
        %v1307 = vpop.f32.mrf.mxu0
        %v1308 = vadd.f32 0.0, %v1307
        %v1309 = vpop.f32.mrf.mxu0
        %1310 = vmatprep.mubr.bf16.mxu0 0
        %1311 = vmatmul.mubr.bf16.gmra.mxu0 %v1251
        %v1312 = vpop.f32.mrf.mxu0
        %v1313 = vadd.f32 0.0, %v1312
        %v1314 = vpop.f32.mrf.mxu0
        %v1315 = vpop.f32.mrf.mxu0
        %v1316 = vadd.f32 0.0, %v1315
        %v1317 = vpop.f32.mrf.mxu0
        %1318 = vmatprep.mubr.bf16.mxu0 0
        %1319 = vmatmul.mubr.bf16.gmra.mxu0 %v1254
        %v1320 = vpop.f32.mrf.mxu0
        %v1321 = vadd.f32 0.0, %v1320
        %v1322 = vpop.f32.mrf.mxu0
        %v1323 = vpop.f32.mrf.mxu0
        %v1324 = vadd.f32 0.0, %v1323
        %v1325 = vpop.f32.mrf.mxu0
        %1326 = vmatprep.mubr.bf16.mxu0 0
        %1327 = vmatmul.mubr.bf16.gmra.mxu0 %v1257
        %v1328 = vpop.f32.mrf.mxu0
        %v1329 = vadd.f32 0.0, %v1328
        %v1330 = vpop.f32.mrf.mxu0
        %v1331 = vpop.f32.mrf.mxu0
        %v1332 = vadd.f32 0.0, %v1331
        %v1333 = vpop.f32.mrf.mxu0
        %1334 = vmatprep.mubr.bf16.mxu0 0
        %1335 = vmatmul.mubr.bf16.gmra.mxu0 %v1260
        %v1336 = vpop.f32.mrf.mxu0
        %v1337 = vadd.f32 0.0, %v1336
        %v1338 = vpop.f32.mrf.mxu0
        %v1339 = vpop.f32.mrf.mxu0
        %v1340 = vadd.f32 0.0, %v1339
        %v1341 = vpop.f32.mrf.mxu0
        %1342 = vdwg.mxu0
        %v1344 = vsel %vm487, %v1154, 0
        %v1347 = vsel %vm487, %v1155, 0
        %v1350 = vsel %vm487, %v1156, 0
        %v1353 = vsel %vm487, %v1157, 0
        %v1356 = vsel %vm487, %v1158, 0
        %v1359 = vsel %vm487, %v1159, 0
        %1361 = vmatprep.subr.bf16.mxu0 0
        %1362 = vmatpush1.bf16.msra.mxu0 0
        %1363 = vmatprep.subr.bf16.mxu0 0
        %1364 = vmatpush1.bf16.msra.mxu0 0
        %1365 = vmatprep.subr.bf16.mxu0 0
        %1366 = vmatpush1.bf16.msra.mxu0 %v1231
        %1367 = vmatprep.subr.bf16.mxu0 0
        %1368 = vmatpush1.bf16.msra.mxu0 %v1230
        %1369 = vmatprep.subr.bf16.mxu0 0
        %1370 = vmatpush1.bf16.msra.mxu0 %v1229
        %1371 = vmatprep.subr.bf16.mxu0 0
        %1372 = vmatpush1.bf16.msra.mxu0 %v1228
        %1373 = vmatprep.subr.bf16.mxu0 0
        %1374 = vmatpush1.bf16.msra.mxu0 %v1227
        %1375 = vmatprep.subr.bf16.mxu0 0
        %1376 = vmatpush1.bf16.msra.mxu0 %v1226
        %1377 = vmatprep.subr.bf16.mxu0 0
        %1378 = vmatpush2.bf16.msra.mxu0 0
        %1379 = vmatprep.subr.bf16.mxu0 0
        %1380 = vmatpush2.bf16.msra.mxu0 0
        %1381 = vmatprep.subr.bf16.mxu0 0
        %1382 = vmatpush2.bf16.msra.mxu0 0
        %1383 = vmatprep.subr.bf16.mxu0 0
        %1384 = vmatpush2.bf16.msra.mxu0 0
        %1385 = vmatprep.subr.bf16.mxu0 0
        %1386 = vmatpush2.bf16.msra.mxu0 0
        %1387 = vmatprep.subr.bf16.mxu0 0
        %1388 = vmatpush2.bf16.msra.mxu0 0
        %1389 = vmatprep.subr.bf16.mxu0 0
        %1390 = vmatpush2.bf16.msra.mxu0 0
        %1391 = vmatprep.subr.bf16.mxu0 0
        %1392 = vmatpush2.bf16.msra.mxu0 0
        %1393 = vmatprep.mubr.bf16.mxu0 0
        %1394 = vmatmul.mubr.bf16.gmra.mxu0 %v1344
        %v1395 = vpop.f32.mrf.mxu0
        %v1396 = vadd.f32 0.0, %v1395
        %v1397 = vpop.f32.mrf.mxu0
        %v1398 = vpop.f32.mrf.mxu0
        %v1399 = vadd.f32 0.0, %v1398
        %v1400 = vpop.f32.mrf.mxu0
        %1401 = vmatprep.mubr.bf16.mxu0 0
        %1402 = vmatmul.mubr.bf16.gmra.mxu0 %v1347
        %v1403 = vpop.f32.mrf.mxu0
        %v1404 = vadd.f32 0.0, %v1403
        %v1405 = vpop.f32.mrf.mxu0
        %v1406 = vpop.f32.mrf.mxu0
        %v1407 = vadd.f32 0.0, %v1406
        %v1408 = vpop.f32.mrf.mxu0
        %1409 = vmatprep.mubr.bf16.mxu0 0
        %1410 = vmatmul.mubr.bf16.gmra.mxu0 %v1350
        %v1411 = vpop.f32.mrf.mxu0
        %v1412 = vadd.f32 0.0, %v1411
        %v1413 = vpop.f32.mrf.mxu0
        %v1414 = vpop.f32.mrf.mxu0
        %v1415 = vadd.f32 0.0, %v1414
        %v1416 = vpop.f32.mrf.mxu0
        %1417 = vmatprep.mubr.bf16.mxu0 0
        %1418 = vmatmul.mubr.bf16.gmra.mxu0 %v1353
        %v1419 = vpop.f32.mrf.mxu0
        %v1420 = vadd.f32 0.0, %v1419
        %v1421 = vpop.f32.mrf.mxu0
        %v1422 = vpop.f32.mrf.mxu0
        %v1423 = vadd.f32 0.0, %v1422
        %v1424 = vpop.f32.mrf.mxu0
        %1425 = vmatprep.mubr.bf16.mxu0 0
        %1426 = vmatmul.mubr.bf16.gmra.mxu0 %v1356
        %v1427 = vpop.f32.mrf.mxu0
        %v1428 = vadd.f32 0.0, %v1427
        %v1429 = vpop.f32.mrf.mxu0
        %v1430 = vpop.f32.mrf.mxu0
        %v1431 = vadd.f32 0.0, %v1430
        %v1432 = vpop.f32.mrf.mxu0
        %1433 = vmatprep.mubr.bf16.mxu0 0
        %1434 = vmatmul.mubr.bf16.gmra.mxu0 %v1359
        %v1435 = vpop.f32.mrf.mxu0
        %v1436 = vadd.f32 0.0, %v1435
        %v1437 = vpop.f32.mrf.mxu0
        %v1438 = vpop.f32.mrf.mxu0
        %v1439 = vadd.f32 0.0, %v1438
        %v1440 = vpop.f32.mrf.mxu0
        %1441 = vdwg.mxu0
        %v1443 = vsel %vm487, %v1160, 0
        %v1446 = vsel %vm487, %v1161, 0
        %v1449 = vsel %vm487, %v1162, 0
        %v1452 = vsel %vm487, %v1163, 0
        %v1455 = vsel %vm487, %v1164, 0
        %v1458 = vsel %vm487, %v1165, 0
        %1460 = vmatprep.subr.bf16.mxu0 0
        %1461 = vmatpush1.bf16.msra.mxu0 0
        %1462 = vmatprep.subr.bf16.mxu0 0
        %1463 = vmatpush1.bf16.msra.mxu0 0
        %1464 = vmatprep.subr.bf16.mxu0 0
        %1465 = vmatpush1.bf16.msra.mxu0 %v1237
        %1466 = vmatprep.subr.bf16.mxu0 0
        %1467 = vmatpush1.bf16.msra.mxu0 %v1236
        %1468 = vmatprep.subr.bf16.mxu0 0
        %1469 = vmatpush1.bf16.msra.mxu0 %v1235
        %1470 = vmatprep.subr.bf16.mxu0 0
        %1471 = vmatpush1.bf16.msra.mxu0 %v1234
        %1472 = vmatprep.subr.bf16.mxu0 0
        %1473 = vmatpush1.bf16.msra.mxu0 %v1233
        %1474 = vmatprep.subr.bf16.mxu0 0
        %1475 = vmatpush1.bf16.msra.mxu0 %v1232
        %1476 = vmatprep.subr.bf16.mxu0 0
        %1477 = vmatpush2.bf16.msra.mxu0 0
        %1478 = vmatprep.subr.bf16.mxu0 0
        %1479 = vmatpush2.bf16.msra.mxu0 0
        %1480 = vmatprep.subr.bf16.mxu0 0
        %1481 = vmatpush2.bf16.msra.mxu0 0
        %1482 = vmatprep.subr.bf16.mxu0 0
        %1483 = vmatpush2.bf16.msra.mxu0 0
        %1484 = vmatprep.subr.bf16.mxu0 0
        %1485 = vmatpush2.bf16.msra.mxu0 0
        %1486 = vmatprep.subr.bf16.mxu0 0
        %1487 = vmatpush2.bf16.msra.mxu0 0
        %1488 = vmatprep.subr.bf16.mxu0 0
        %1489 = vmatpush2.bf16.msra.mxu0 0
        %1490 = vmatprep.subr.bf16.mxu0 0
        %1491 = vmatpush2.bf16.msra.mxu0 0
        %1492 = vmatprep.mubr.bf16.mxu0 0
        %1493 = vmatmul.mubr.bf16.gmra.mxu0 %v1443
        %v1494 = vpop.f32.mrf.mxu0
        %v1495 = vadd.f32 0.0, %v1494
        %v1496 = vpop.f32.mrf.mxu0
        %v1497 = vpop.f32.mrf.mxu0
        %v1498 = vadd.f32 0.0, %v1497
        %v1499 = vpop.f32.mrf.mxu0
        %1500 = vmatprep.mubr.bf16.mxu0 0
        %1501 = vmatmul.mubr.bf16.gmra.mxu0 %v1446
        %v1502 = vpop.f32.mrf.mxu0
        %v1503 = vadd.f32 0.0, %v1502
        %v1504 = vpop.f32.mrf.mxu0
        %v1505 = vpop.f32.mrf.mxu0
        %v1506 = vadd.f32 0.0, %v1505
        %v1507 = vpop.f32.mrf.mxu0
        %1508 = vmatprep.mubr.bf16.mxu0 0
        %1509 = vmatmul.mubr.bf16.gmra.mxu0 %v1449
        %v1510 = vpop.f32.mrf.mxu0
        %v1511 = vadd.f32 0.0, %v1510
        %v1512 = vpop.f32.mrf.mxu0
        %v1513 = vpop.f32.mrf.mxu0
        %v1514 = vadd.f32 0.0, %v1513
        %v1515 = vpop.f32.mrf.mxu0
        %1516 = vmatprep.mubr.bf16.mxu0 0
        %1517 = vmatmul.mubr.bf16.gmra.mxu0 %v1452
        %v1518 = vpop.f32.mrf.mxu0
        %v1519 = vadd.f32 0.0, %v1518
        %v1520 = vpop.f32.mrf.mxu0
        %v1521 = vpop.f32.mrf.mxu0
        %v1522 = vadd.f32 0.0, %v1521
        %v1523 = vpop.f32.mrf.mxu0
        %1524 = vmatprep.mubr.bf16.mxu0 0
        %1525 = vmatmul.mubr.bf16.gmra.mxu0 %v1455
        %v1526 = vpop.f32.mrf.mxu0
        %v1527 = vadd.f32 0.0, %v1526
        %v1528 = vpop.f32.mrf.mxu0
        %v1529 = vpop.f32.mrf.mxu0
        %v1530 = vadd.f32 0.0, %v1529
        %v1531 = vpop.f32.mrf.mxu0
        %1532 = vmatprep.mubr.bf16.mxu0 0
        %1533 = vmatmul.mubr.bf16.gmra.mxu0 %v1458
        %v1534 = vpop.f32.mrf.mxu0
        %v1535 = vadd.f32 0.0, %v1534
        %v1536 = vpop.f32.mrf.mxu0
        %v1537 = vpop.f32.mrf.mxu0
        %v1538 = vadd.f32 0.0, %v1537
        %v1539 = vpop.f32.mrf.mxu0
        %1540 = vdwg.mxu0
        %v1542 = vsel %vm487, %v1166, 0
        %v1545 = vsel %vm487, %v1167, 0
        %v1548 = vsel %vm487, %v1168, 0
        %v1551 = vsel %vm487, %v1169, 0
        %v1554 = vsel %vm487, %v1170, 0
        %v1557 = vsel %vm487, %v1171, 0
        %1559 = vmatprep.subr.bf16.mxu0 0
        %1560 = vmatpush1.bf16.msra.mxu0 0
        %1561 = vmatprep.subr.bf16.mxu0 0
        %1562 = vmatpush1.bf16.msra.mxu0 0
        %1563 = vmatprep.subr.bf16.mxu0 0
        %1564 = vmatpush1.bf16.msra.mxu0 %v1243
        %1565 = vmatprep.subr.bf16.mxu0 0
        %1566 = vmatpush1.bf16.msra.mxu0 %v1242
        %1567 = vmatprep.subr.bf16.mxu0 0
        %1568 = vmatpush1.bf16.msra.mxu0 %v1241
        %1569 = vmatprep.subr.bf16.mxu0 0
        %1570 = vmatpush1.bf16.msra.mxu0 %v1240
        %1571 = vmatprep.subr.bf16.mxu0 0
        %1572 = vmatpush1.bf16.msra.mxu0 %v1239
        %1573 = vmatprep.subr.bf16.mxu0 0
        %1574 = vmatpush1.bf16.msra.mxu0 %v1238
        %1575 = vmatprep.subr.bf16.mxu0 0
        %1576 = vmatpush2.bf16.msra.mxu0 0
        %1577 = vmatprep.subr.bf16.mxu0 0
        %1578 = vmatpush2.bf16.msra.mxu0 0
        %1579 = vmatprep.subr.bf16.mxu0 0
        %1580 = vmatpush2.bf16.msra.mxu0 0
        %1581 = vmatprep.subr.bf16.mxu0 0
        %1582 = vmatpush2.bf16.msra.mxu0 0
        %1583 = vmatprep.subr.bf16.mxu0 0
        %1584 = vmatpush2.bf16.msra.mxu0 0
        %1585 = vmatprep.subr.bf16.mxu0 0
        %1586 = vmatpush2.bf16.msra.mxu0 0
        %1587 = vmatprep.subr.bf16.mxu0 0
        %1588 = vmatpush2.bf16.msra.mxu0 0
        %1589 = vmatprep.subr.bf16.mxu0 0
        %1590 = vmatpush2.bf16.msra.mxu0 0
        %1591 = vmatprep.mubr.bf16.mxu0 0
        %1592 = vmatmul.mubr.bf16.gmra.mxu0 %v1542
        %v1593 = vpop.f32.mrf.mxu0
        %v1594 = vadd.f32 0.0, %v1593
        %v1595 = vpop.f32.mrf.mxu0
        %v1596 = vpop.f32.mrf.mxu0
        %v1597 = vadd.f32 0.0, %v1596
        %v1598 = vpop.f32.mrf.mxu0
        %1599 = vmatprep.mubr.bf16.mxu0 0
        %1600 = vmatmul.mubr.bf16.gmra.mxu0 %v1545
        %v1601 = vpop.f32.mrf.mxu0
        %v1602 = vadd.f32 0.0, %v1601
        %v1603 = vpop.f32.mrf.mxu0
        %v1604 = vpop.f32.mrf.mxu0
        %v1605 = vadd.f32 0.0, %v1604
        %v1606 = vpop.f32.mrf.mxu0
        %1607 = vmatprep.mubr.bf16.mxu0 0
        %1608 = vmatmul.mubr.bf16.gmra.mxu0 %v1548
        %v1609 = vpop.f32.mrf.mxu0
        %v1610 = vadd.f32 0.0, %v1609
        %v1611 = vpop.f32.mrf.mxu0
        %v1612 = vpop.f32.mrf.mxu0
        %v1613 = vadd.f32 0.0, %v1612
        %v1614 = vpop.f32.mrf.mxu0
        %1615 = vmatprep.mubr.bf16.mxu0 0
        %1616 = vmatmul.mubr.bf16.gmra.mxu0 %v1551
        %v1617 = vpop.f32.mrf.mxu0
        %v1618 = vadd.f32 0.0, %v1617
        %v1619 = vpop.f32.mrf.mxu0
        %v1620 = vpop.f32.mrf.mxu0
        %v1621 = vadd.f32 0.0, %v1620
        %v1622 = vpop.f32.mrf.mxu0
        %1623 = vmatprep.mubr.bf16.mxu0 0
        %1624 = vmatmul.mubr.bf16.gmra.mxu0 %v1554
        %v1625 = vpop.f32.mrf.mxu0
        %v1626 = vadd.f32 0.0, %v1625
        %v1627 = vpop.f32.mrf.mxu0
        %v1628 = vpop.f32.mrf.mxu0
        %v1629 = vadd.f32 0.0, %v1628
        %v1630 = vpop.f32.mrf.mxu0
        %1631 = vmatprep.mubr.bf16.mxu0 0
        %1632 = vmatmul.mubr.bf16.gmra.mxu0 %v1557
        %v1633 = vpop.f32.mrf.mxu0
        %v1634 = vadd.f32 0.0, %v1633
        %v1635 = vpop.f32.mrf.mxu0
        %v1636 = vpop.f32.mrf.mxu0
        %v1637 = vadd.f32 0.0, %v1636
        %v1638 = vpop.f32.mrf.mxu0
        %1639 = vdwg.mxu0
        %1640 = vst.msk [vmem:[%s336] sm:$0xff] %vm487, %v1297
        %1641 = vst.msk [vmem:[%s336 + $0x8] sm:$0xff] %vm487, %v1300
        %1642 = vst.msk [vmem:[%s336 + $0x10] sm:$0xff] %vm487, %v1305
        %1643 = vst.msk [vmem:[%s336 + $0x18] sm:$0xff] %vm487, %v1308
        %1644 = vst.msk [vmem:[%s336 + $0x20] sm:$0xff] %vm487, %v1313
        %1645 = vst.msk [vmem:[%s336 + $0x28] sm:$0xff] %vm487, %v1316
        %1646 = vst.msk [vmem:[%s336 + $0x30] sm:$0xff] %vm487, %v1321
        %1647 = vst.msk [vmem:[%s336 + $0x38] sm:$0xff] %vm487, %v1324
        %1648 = vst.msk [vmem:[%s336 + $0x40] sm:$0xff] %vm487, %v1329
        %1649 = vst.msk [vmem:[%s336 + $0x48] sm:$0xff] %vm487, %v1332
        %1650 = vst.msk [vmem:[%s336 + $0x50] sm:$0xff] %vm487, %v1337
        %1651 = vst.msk [vmem:[%s336 + $0x58] sm:$0xff] %vm487, %v1340
        %1652 = vst.msk [vmem:[%s336 + $0x60] sm:$0xff] %vm487, %v1396
        %1653 = vst.msk [vmem:[%s336 + $0x68] sm:$0xff] %vm487, %v1399
        %1654 = vst.msk [vmem:[%s336 + $0x70] sm:$0xff] %vm487, %v1404
        %1655 = vst.msk [vmem:[%s336 + $0x78] sm:$0xff] %vm487, %v1407
        %1656 = vst.msk [vmem:[%s336 + $0x80] sm:$0xff] %vm487, %v1412
        %1657 = vst.msk [vmem:[%s336 + $0x88] sm:$0xff] %vm487, %v1415
        %1658 = vst.msk [vmem:[%s336 + $0x90] sm:$0xff] %vm487, %v1420
        %1659 = vst.msk [vmem:[%s336 + $0x98] sm:$0xff] %vm487, %v1423
        %1660 = vst.msk [vmem:[%s336 + $0xa0] sm:$0xff] %vm487, %v1428
        %1661 = vst.msk [vmem:[%s336 + $0xa8] sm:$0xff] %vm487, %v1431
        %1662 = vst.msk [vmem:[%s336 + $0xb0] sm:$0xff] %vm487, %v1436
        %1663 = vst.msk [vmem:[%s336 + $0xb8] sm:$0xff] %vm487, %v1439
        %1664 = vst.msk [vmem:[%s336 + $0xc0] sm:$0xff] %vm487, %v1495
        %1665 = vst.msk [vmem:[%s336 + $0xc8] sm:$0xff] %vm487, %v1498
        %1666 = vst.msk [vmem:[%s336 + $0xd0] sm:$0xff] %vm487, %v1503
        %1667 = vst.msk [vmem:[%s336 + $0xd8] sm:$0xff] %vm487, %v1506
        %1668 = vst.msk [vmem:[%s336 + $0xe0] sm:$0xff] %vm487, %v1511
        %1669 = vst.msk [vmem:[%s336 + $0xe8] sm:$0xff] %vm487, %v1514
        %1670 = vst.msk [vmem:[%s336 + $0xf0] sm:$0xff] %vm487, %v1519
        %1671 = vst.msk [vmem:[%s336 + $0xf8] sm:$0xff] %vm487, %v1522
        %1672 = vst.msk [vmem:[%s336 + $0x100] sm:$0xff] %vm487, %v1527
        %1673 = vst.msk [vmem:[%s336 + $0x108] sm:$0xff] %vm487, %v1530
        %1674 = vst.msk [vmem:[%s336 + $0x110] sm:$0xff] %vm487, %v1535
        %1675 = vst.msk [vmem:[%s336 + $0x118] sm:$0xff] %vm487, %v1538
        %1676 = vst.msk [vmem:[%s336 + $0x120] sm:$0xff] %vm487, %v1594
        %1677 = vst.msk [vmem:[%s336 + $0x128] sm:$0xff] %vm487, %v1597
        %1678 = vst.msk [vmem:[%s336 + $0x130] sm:$0xff] %vm487, %v1602
        %1679 = vst.msk [vmem:[%s336 + $0x138] sm:$0xff] %vm487, %v1605
        %1680 = vst.msk [vmem:[%s336 + $0x140] sm:$0xff] %vm487, %v1610
        %1681 = vst.msk [vmem:[%s336 + $0x148] sm:$0xff] %vm487, %v1613
        %1682 = vst.msk [vmem:[%s336 + $0x150] sm:$0xff] %vm487, %v1618
        %1683 = vst.msk [vmem:[%s336 + $0x158] sm:$0xff] %vm487, %v1621
        %1684 = vst.msk [vmem:[%s336 + $0x160] sm:$0xff] %vm487, %v1626
        %1685 = vst.msk [vmem:[%s336 + $0x168] sm:$0xff] %vm487, %v1629
        %1686 = vst.msk [vmem:[%s336 + $0x170] sm:$0xff] %vm487, %v1634
        %1687 = vst.msk [vmem:[%s336 + $0x178] sm:$0xff] %vm487, %v1637
        %s1688 = sand.u32 %s139, 1
        %s1689 = scalar_lea.sflag [#allocation4], %s1688
        %s1690 = sand.u32 %s139, 1
        %s1691 = smul.addr %s1690, 384
        %s1692 = scalar_lea.vmem [#allocation10], %s1691
        // Predicated region
        $region53: #{tpu_custom_call.1} parent=35 // pred_check
          %p1693 = pneg %p149
        $region54: #{tpu_custom_call.1} parent=35 // pred_check_branch
          %1695 = sbr.rel (%p1693) target = $region56
        $region55: #{tpu_custom_call.1} parent=35 // pred_region
          %s1696 = smul.u32 4, %s27
          %s1698 = ssub.s32 6144, 6144
          %1699 = vsyncadd %s1689, %s1698
          %s1700 = smul.addr %s1696, 12
          %s1701 = smul.addr %s1700, 128
          %s1702 = scalar_lea.hbm %s4, %s1701
          %s1703 = sshll.u32 %s1692, 4
          %s1704 = int_to_ptr.vmem [resolvable:$true] %s1703
          %1709 = dma.vmem_to_hbm [thread:$0]  %s1704, 6144, %s1702, %s1689, 128, 128, 8
        $region56: #{tpu_custom_call.1} parent=35 // pred_fallthru
          _
      $region36: #{tpu_custom_call.1} parent=5 // pred_fallthru
        _
      %p1710 = scmp.le.s32.totalorder 2, %s22
      // Predicated region
      $region57: #{tpu_custom_call.1} parent=5 // pred_check
        %p1711 = pneg %p1710
      $region58: #{tpu_custom_call.1} parent=5 // pred_check_branch
        %1713 = sbr.rel (%p1711) target = $region60
      $region59: #{tpu_custom_call.1} parent=5 // pred_region
        %s1714 = ssub.s32 %s22, 2
        // Predicated region
        $region61: #{tpu_custom_call.1} parent=59 // pred_check
          %p1715 = pneg %p155
        $region62: #{tpu_custom_call.1} parent=59 // pred_check_branch
          %1717 = sbr.rel (%p1715) target = $region64
        $region63: #{tpu_custom_call.1} parent=59 // pred_region
          %s1718 = sand.u32 %s140, 1
          %s1719 = scalar_lea.sflag [#allocation4], %s1718
          %s1720 = sand.u32 %s140, 1
          %s1721 = smul.addr %s1720, 384
          %s1722 = scalar_lea.vmem [#allocation10], %s1721
          %1723 = dma.done %s1719, 6144
        $region64: #{tpu_custom_call.1} parent=59 // pred_fallthru
          _
      $region60: #{tpu_custom_call.1} parent=5 // pred_fallthru
        _
    $region6: #{tpu_custom_call.1} parent=1 // loop_footer
      %s26 = sadd.s32 1, %s22
    $region7: #{tpu_custom_call.1} parent=1 // loop_footer_branch
      %21 = sbr.rel target = $region3
    $region8: #{tpu_custom_call.1} parent=1 // loop_exit
      _
    %1724 = vsyncpa [#allocation3], 1
    %s1725 = scalar_lea.sflag [#allocation3], 1
    %1726 = vsyncpa %s1725, 1
    %1727 = vsyncpa [#allocation6], 1
    %s1728 = scalar_lea.sflag [#allocation6], 1
    %1729 = vsyncpa %s1728, 1
    %1730 = vsyncpa [#allocation9], 1
    %s1731 = scalar_lea.sflag [#allocation9], 1
    %1732 = vsyncpa %s1731, 1
    %1733 = vsyncpa [#allocation4], 1
    %s1734 = scalar_lea.sflag [#allocation4], 1
    %1735 = vsyncpa %s1734, 1

</llo_original>
